<compile_context>
chip_gen: v6e
topology: v6e:2x2x1
jax: 0.10.0
libtpu: 0.0.40
codegen_flags: <defaults>
</compile_context>

<pallas_src>
import jax
import jax.numpy as jnp
from jax.experimental import pallas as pl
from jax.experimental.pallas import tpu as pltpu

D_IN, D_H1, D_H2, D_H3, D_OUT = 3000, 50, 30, 10, 1


def _round_up(n, m):
    return ((n + m - 1) // m) * m


def mlp_kernel(x_ref, w1_ref, b1_ref, w2_ref, b2_ref, w3_ref, b3_ref,
               w4_ref, b4_ref, o_ref):
    """One batch tile: x (TB, 3000) -> o (1, TB) (lane-dense sigmoid output)."""
    x = x_ref[...]                                            # (TB, 3000)

    # Layer 1 (>99% of FLOPs and bytes): MXU matmul, f32 accumulation even if
    # x / w1 are bf16.
    h1 = jnp.dot(x, w1_ref[...], preferred_element_type=jnp.float32)
    h1 = jnp.maximum(h1 + b1_ref[...], 0.0)                   # (TB, 50) f32

    # Layers 2-3: tiny MXU matmuls, f32.
    h2 = jnp.dot(h1, w2_ref[...], preferred_element_type=jnp.float32)
    h2 = jnp.maximum(h2 + b2_ref[...], 0.0)                   # (TB, 30)

    h3 = jnp.dot(h2, w3_ref[...], preferred_element_type=jnp.float32)
    h3 = jnp.maximum(h3 + b3_ref[...], 0.0)                   # (TB, 10)

    # Layer 4 (K=10, N=1): VPU multiply + sublane reduce instead of a nearly
    # empty MXU matmul; produces the result lane-dense (batch on lanes) so the
    # output store/DMA is unmasked.
    h3t = jnp.transpose(h3)                                   # (10, TB)
    h4 = jnp.sum(w4_ref[...] * h3t, axis=0, keepdims=True)    # (1, TB)
    h4 = h4 + b4_ref[...]
    o_ref[...] = jax.nn.sigmoid(h4)


def net_forward(x, params, *, max_tile_b=512):
    """Forward pass of Net.

    x: (B, 3000) f32 or bf16.  params: weights stored (in, out), biases
    (1, out) (so w4 is (10, 1), b4 is (1, 1)).

    max_tile_b=512 is safe on every TPU generation (v7x has only 64 MiB
    physical VMEM); use 1024/2048 on v5e/v6e for very large batches.
    """
    B, d_in = x.shape
    assert d_in == D_IN, x.shape

    # Batch tiling: one full tile for small B, otherwise a multiple of 128 so
    # the lane-dense output block satisfies the (8, 128) layout constraint.
    if B <= max_tile_b:
        tile_b = _round_up(B, 8)
    else:
        tile_b = max(128, (max_tile_b // 128) * 128)
    b_pad = _round_up(B, tile_b)
    if b_pad != B:
        x = jnp.pad(x, ((0, b_pad - B), (0, 0)))
    grid = (b_pad // tile_b,)

    w1 = params["w1"].astype(x.dtype)          # layer-1 matmul in x's dtype
    b1, w2, b2, w3, b3, w4, b4 = (
        params["b1"], params["w2"], params["b2"], params["w3"],
        params["b3"], params["w4"], params["b4"])

    # Weights/biases: full-array blocks with a constant index_map -> they are
    # DMA'd once and stay VMEM-resident across all grid steps.
    resident = lambda arr: pl.BlockSpec(arr.shape, lambda i: (0, 0))

    flops = 2 * b_pad * (D_IN * D_H1 + D_H1 * D_H2 + D_H2 * D_H3 + D_H3 * D_OUT)
    bytes_accessed = (
        b_pad * D_IN * x.dtype.itemsize
        + sum(int(p.size) * p.dtype.itemsize
              for p in (w1, b1, w2, b2, w3, b3, w4, b4))
        + b_pad * 4)
    cost = pl.CostEstimate(flops=flops, transcendentals=b_pad,
                           bytes_accessed=bytes_accessed)

    x_tile_bytes = tile_b * D_IN * x.dtype.itemsize
    vmem_limit = int(max(32 << 20, min(2 * x_tile_bytes + (8 << 20), 120 << 20)))

    out = pl.pallas_call(
        mlp_kernel,
        out_shape=jax.ShapeDtypeStruct((1, b_pad), jnp.float32),
        grid=grid,
        in_specs=[
            pl.BlockSpec((tile_b, D_IN), lambda i: (i, 0)),    # x tiled on batch
            resident(w1), resident(b1),
            resident(w2), resident(b2),
            resident(w3), resident(b3),
            resident(w4), resident(b4),
        ],
        out_specs=pl.BlockSpec((1, tile_b), lambda i: (0, i)),  # lane-dense
        compiler_params=pltpu.CompilerParams(
            dimension_semantics=("parallel",),
            vmem_limit_bytes=vmem_limit),
        cost_estimate=cost,
    )(x, w1, b1, w2, b2, w3, b3, w4, b4)                        # (1, b_pad)

    return out[0, :B][:, None]                                  # (B, 1)


def init_params(key):
    """PyTorch-style init U(-1/sqrt(fan_in), 1/sqrt(fan_in)); weights stored
    transposed as (in, out) so the kernel computes x @ W."""
    dims = [(D_IN, D_H1), (D_H1, D_H2), (D_H2, D_H3), (D_H3, D_OUT)]
    params = {}
    for i, (fan_in, fan_out) in enumerate(dims, start=1):
        key, kw, kb = jax.random.split(key, 3)
        bound = 1.0 / (fan_in ** 0.5)
        params[f"w{i}"] = jax.random.uniform(
            kw, (fan_in, fan_out), jnp.float32, -bound, bound)
        params[f"b{i}"] = jax.random.uniform(
            kb, (1, fan_out), jnp.float32, -bound, bound)
    return params


def reference_forward(x, p):
    """Plain-JAX reference."""
    h = jnp.maximum(x @ p["w1"] + p["b1"], 0.0)
    h = jnp.maximum(h @ p["w2"] + p["b2"], 0.0)
    h = jnp.maximum(h @ p["w3"] + p["b3"], 0.0)
    return jax.nn.sigmoid(h @ p["w4"] + p["b4"])


if __name__ == "__main__":
    key = jax.random.PRNGKey(0)
    key, kx = jax.random.split(key)

    # Small single-tile case.
    B = 8
    x = jax.random.normal(kx, (B, D_IN), jnp.float32)
    params = init_params(key)

    out = jax.block_until_ready(net_forward(x, params))
    ref = reference_forward(x, params)
    assert out.shape == (B, 1), out.shape
    assert jnp.allclose(out, ref, atol=1e-5, rtol=1e-5), (
        float(jnp.max(jnp.abs(out - ref))))

    # Multi-tile + padding path (grid > 1; weights stay VMEM-resident).
    key, kx2 = jax.random.split(key)
    B2 = 300
    x2 = jax.random.normal(kx2, (B2, D_IN), jnp.float32)
    out2 = jax.block_until_ready(net_forward(x2, params, max_tile_b=128))
    ref2 = reference_forward(x2, params)
    assert out2.shape == (B2, 1), out2.shape
    assert jnp.allclose(out2, ref2, atol=1e-5, rtol=1e-5), (
        float(jnp.max(jnp.abs(out2 - ref2))))

    # bf16 layer-1 path (halves HBM traffic on the dominant input); loose tol.
    out_bf16 = jax.block_until_ready(net_forward(x.astype(jnp.bfloat16), params))
    assert out_bf16.shape == (B, 1), out_bf16.shape
    assert jnp.allclose(out_bf16.astype(jnp.float32), ref, atol=5e-2), (
        float(jnp.max(jnp.abs(out_bf16.astype(jnp.float32) - ref))))

    print("KERNEL_OK")
</pallas_src>

<mosaic_0001>
module attributes {stable_mosaic.version = 11 : i64} {
  func.func @mlp_kernel(%arg0: i32, %arg1: memref<8x3000xf32, #tpu.memory_space<vmem>>, %arg2: memref<3000x50xf32, #tpu.memory_space<vmem>>, %arg3: memref<1x50xf32, #tpu.memory_space<vmem>>, %arg4: memref<50x30xf32, #tpu.memory_space<vmem>>, %arg5: memref<1x30xf32, #tpu.memory_space<vmem>>, %arg6: memref<30x10xf32, #tpu.memory_space<vmem>>, %arg7: memref<1x10xf32, #tpu.memory_space<vmem>>, %arg8: memref<10x1xf32, #tpu.memory_space<vmem>>, %arg9: memref<1x1xf32, #tpu.memory_space<vmem>>, %arg10: memref<1x8xf32, #tpu.memory_space<vmem>>) attributes {dimension_semantics = [#tpu.dimension_semantics<parallel>], iteration_bounds = array<i64: 1>, scalar_prefetch = 0 : i64, scratch_operands = 0 : i64, tpu.core_type = #tpu.core_type<tc>, window_params = [{transform_indices = @transform_0, window_bounds = array<i64: 8, 3000>}, {pipeline_mode = #tpu.pipeline_mode<synchronous>, transform_indices = @transform_1, window_bounds = array<i64: 3000, 50>}, {pipeline_mode = #tpu.pipeline_mode<synchronous>, transform_indices = @transform_2, window_bounds = array<i64: 1, 50>}, {pipeline_mode = #tpu.pipeline_mode<synchronous>, transform_indices = @transform_3, window_bounds = array<i64: 50, 30>}, {pipeline_mode = #tpu.pipeline_mode<synchronous>, transform_indices = @transform_4, window_bounds = array<i64: 1, 30>}, {pipeline_mode = #tpu.pipeline_mode<synchronous>, transform_indices = @transform_5, window_bounds = array<i64: 30, 10>}, {pipeline_mode = #tpu.pipeline_mode<synchronous>, transform_indices = @transform_6, window_bounds = array<i64: 1, 10>}, {pipeline_mode = #tpu.pipeline_mode<synchronous>, transform_indices = @transform_7, window_bounds = array<i64: 10, 1>}, {pipeline_mode = #tpu.pipeline_mode<synchronous>, transform_indices = @transform_8, window_bounds = array<i64: 1, 1>}, {transform_indices = @transform_9, window_bounds = array<i64: 1, 8>}]} {
    %c0 = arith.constant 0 : index
    %c0_0 = arith.constant 0 : index
    %0 = vector.load %arg1[%c0, %c0_0] : memref<8x3000xf32, #tpu.memory_space<vmem>>, vector<8x3000xf32>
    %c0_1 = arith.constant 0 : index
    %c0_2 = arith.constant 0 : index
    %1 = vector.load %arg2[%c0_1, %c0_2] : memref<3000x50xf32, #tpu.memory_space<vmem>>, vector<3000x50xf32>
    %cst = arith.constant dense<0.000000e+00> : vector<8x50xf32>
    %2 = tpu.matmul %0, %1, %cst {dimension_numbers = #tpu.dot_dimension_numbers<[1], [0], [0], [1], [0, 0, 1, 1], [], []>} : vector<8x3000xf32>, vector<3000x50xf32>, vector<8x50xf32> -> vector<8x50xf32>
    %c0_3 = arith.constant 0 : index
    %c0_4 = arith.constant 0 : index
    %3 = vector.load %arg3[%c0_3, %c0_4] : memref<1x50xf32, #tpu.memory_space<vmem>>, vector<1x50xf32>
    %4 = vector.broadcast %3 : vector<1x50xf32> to vector<8x50xf32>
    %5 = arith.addf %2, %4 : vector<8x50xf32>
    %cst_5 = arith.constant 0.000000e+00 : f32
    %6 = vector.broadcast %cst_5 : f32 to vector<8x50xf32>
    %7 = arith.maximumf %5, %6 : vector<8x50xf32>
    %c0_6 = arith.constant 0 : index
    %c0_7 = arith.constant 0 : index
    %8 = vector.load %arg4[%c0_6, %c0_7] : memref<50x30xf32, #tpu.memory_space<vmem>>, vector<50x30xf32>
    %cst_8 = arith.constant dense<0.000000e+00> : vector<8x30xf32>
    %9 = tpu.matmul %7, %8, %cst_8 {dimension_numbers = #tpu.dot_dimension_numbers<[1], [0], [0], [1], [0, 0, 1, 1], [], []>} : vector<8x50xf32>, vector<50x30xf32>, vector<8x30xf32> -> vector<8x30xf32>
    %c0_9 = arith.constant 0 : index
    %c0_10 = arith.constant 0 : index
    %10 = vector.load %arg5[%c0_9, %c0_10] : memref<1x30xf32, #tpu.memory_space<vmem>>, vector<1x30xf32>
    %11 = vector.broadcast %10 : vector<1x30xf32> to vector<8x30xf32>
    %12 = arith.addf %9, %11 : vector<8x30xf32>
    %cst_11 = arith.constant 0.000000e+00 : f32
    %13 = vector.broadcast %cst_11 : f32 to vector<8x30xf32>
    %14 = arith.maximumf %12, %13 : vector<8x30xf32>
    %c0_12 = arith.constant 0 : index
    %c0_13 = arith.constant 0 : index
    %15 = vector.load %arg6[%c0_12, %c0_13] : memref<30x10xf32, #tpu.memory_space<vmem>>, vector<30x10xf32>
    %cst_14 = arith.constant dense<0.000000e+00> : vector<8x10xf32>
    %16 = tpu.matmul %14, %15, %cst_14 {dimension_numbers = #tpu.dot_dimension_numbers<[1], [0], [0], [1], [0, 0, 1, 1], [], []>} : vector<8x30xf32>, vector<30x10xf32>, vector<8x10xf32> -> vector<8x10xf32>
    %c0_15 = arith.constant 0 : index
    %c0_16 = arith.constant 0 : index
    %17 = vector.load %arg7[%c0_15, %c0_16] : memref<1x10xf32, #tpu.memory_space<vmem>>, vector<1x10xf32>
    %18 = vector.broadcast %17 : vector<1x10xf32> to vector<8x10xf32>
    %19 = arith.addf %16, %18 : vector<8x10xf32>
    %cst_17 = arith.constant 0.000000e+00 : f32
    %20 = vector.broadcast %cst_17 : f32 to vector<8x10xf32>
    %21 = arith.maximumf %19, %20 : vector<8x10xf32>
    %22 = tpu.transpose %21, [1, 0] : vector<8x10xf32> -> vector<10x8xf32>
    %c0_18 = arith.constant 0 : index
    %c0_19 = arith.constant 0 : index
    %23 = vector.load %arg8[%c0_18, %c0_19] : memref<10x1xf32, #tpu.memory_space<vmem>>, vector<10x1xf32>
    %24 = vector.broadcast %23 : vector<10x1xf32> to vector<10x8xf32>
    %25 = arith.mulf %24, %22 : vector<10x8xf32>
    %cst_20 = arith.constant dense<0.000000e+00> : vector<8xf32>
    %26 = vector.multi_reduction <add>, %25, %cst_20 [0] : vector<10x8xf32> to vector<8xf32>
    %27 = vector.shape_cast %26 : vector<8xf32> to vector<1x8xf32>
    %c0_21 = arith.constant 0 : index
    %c0_22 = arith.constant 0 : index
    %28 = vector.load %arg9[%c0_21, %c0_22] : memref<1x1xf32, #tpu.memory_space<vmem>>, vector<1x1xf32>
    %29 = vector.broadcast %28 : vector<1x1xf32> to vector<1x8xf32>
    %30 = arith.addf %27, %29 : vector<1x8xf32>
    %31 = arith.negf %30 : vector<1x8xf32>
    %32 = math.exp %31 : vector<1x8xf32>
    %cst_23 = arith.constant 1.000000e+00 : f32
    %33 = vector.broadcast %cst_23 : f32 to vector<1x8xf32>
    %34 = arith.addf %33, %32 : vector<1x8xf32>
    %35 = arith.divf %33, %34 : vector<1x8xf32>
    %c0_24 = arith.constant 0 : index
    %c0_25 = arith.constant 0 : index
    %36 = vector.load %arg10[%c0_24, %c0_25] : memref<1x8xf32, #tpu.memory_space<vmem>>, vector<1x8xf32>
    tpu.vector_store %arg10[%c0_24, %c0_25], %35 {strides = array<i32>} : memref<1x8xf32, #tpu.memory_space<vmem>>, vector<1x8xf32>,
    return
  }
  func.func @transform_0(%arg0: i32) -> (i32, i32) {
    %c0_i32 = arith.constant 0 : i32
    %c0_i32_0 = arith.constant 0 : i32
    return %arg0, %c0_i32 : i32, i32
  }
  func.func @transform_1(%arg0: i32) -> (i32, i32) {
    %c0_i32 = arith.constant 0 : i32
    %c0_i32_0 = arith.constant 0 : i32
    %c0_i32_1 = arith.constant 0 : i32
    return %c0_i32, %c0_i32_0 : i32, i32
  }
  func.func @transform_2(%arg0: i32) -> (i32, i32) {
    %c0_i32 = arith.constant 0 : i32
    %c0_i32_0 = arith.constant 0 : i32
    %c0_i32_1 = arith.constant 0 : i32
    return %c0_i32, %c0_i32_0 : i32, i32
  }
  func.func @transform_3(%arg0: i32) -> (i32, i32) {
    %c0_i32 = arith.constant 0 : i32
    %c0_i32_0 = arith.constant 0 : i32
    %c0_i32_1 = arith.constant 0 : i32
    return %c0_i32, %c0_i32_0 : i32, i32
  }
  func.func @transform_4(%arg0: i32) -> (i32, i32) {
    %c0_i32 = arith.constant 0 : i32
    %c0_i32_0 = arith.constant 0 : i32
    %c0_i32_1 = arith.constant 0 : i32
    return %c0_i32, %c0_i32_0 : i32, i32
  }
  func.func @transform_5(%arg0: i32) -> (i32, i32) {
    %c0_i32 = arith.constant 0 : i32
    %c0_i32_0 = arith.constant 0 : i32
    %c0_i32_1 = arith.constant 0 : i32
    return %c0_i32, %c0_i32_0 : i32, i32
  }
  func.func @transform_6(%arg0: i32) -> (i32, i32) {
    %c0_i32 = arith.constant 0 : i32
    %c0_i32_0 = arith.constant 0 : i32
    %c0_i32_1 = arith.constant 0 : i32
    return %c0_i32, %c0_i32_0 : i32, i32
  }
  func.func @transform_7(%arg0: i32) -> (i32, i32) {
    %c0_i32 = arith.constant 0 : i32
    %c0_i32_0 = arith.constant 0 : i32
    %c0_i32_1 = arith.constant 0 : i32
    return %c0_i32, %c0_i32_0 : i32, i32
  }
  func.func @transform_8(%arg0: i32) -> (i32, i32) {
    %c0_i32 = arith.constant 0 : i32
    %c0_i32_0 = arith.constant 0 : i32
    %c0_i32_1 = arith.constant 0 : i32
    return %c0_i32, %c0_i32_0 : i32, i32
  }
  func.func @transform_9(%arg0: i32) -> (i32, i32) {
    %c0_i32 = arith.constant 0 : i32
    %c0_i32_0 = arith.constant 0 : i32
    return %c0_i32, %arg0 : i32, i32
  }
}

</mosaic_0001>

<llo_original>
// kernel: tpu_custom_call.1
$region0: #{tpu_custom_call.1}
  #allocation0 [shape = 'u32[]', space=smem, size = 0x4, offset = 0x4, fixed_abs, tag = 'smem constant byte address 0x4 - core index']
  #allocation1 [shape = 'u32[144,128]{1,0:T(1,128)}', space=vmem, size = 0x12000, scoped, tag = 'internal scratch']
  #allocation2 [shape = 'f32[1,1]{1,0:T(1,128)S(1)}', space=vmem, size = 0x200, scoped, tag = 'scoped memory for tpu_custom_call.1']
  %s0 = inlined_call_operand.vmem [shape: f32[8,3000], index: 0, kind: input, shape index: {}]
  %s1 = inlined_call_operand.vmem [shape: f32[3000,50], index: 1, kind: input, shape index: {}]
  %s2 = inlined_call_operand.vmem [shape: f32[1,50], index: 2, kind: input, shape index: {}]
  %s3 = inlined_call_operand.vmem [shape: f32[50,30], index: 3, kind: input, shape index: {}]
  %s4 = inlined_call_operand.vmem [shape: f32[1,30], index: 4, kind: input, shape index: {}]
  %s5 = inlined_call_operand.vmem [shape: f32[30,10], index: 5, kind: input, shape index: {}]
  %s6 = inlined_call_operand.vmem [shape: f32[1,10], index: 6, kind: input, shape index: {}]
  %s7 = inlined_call_operand.vmem [shape: f32[10,1], index: 7, kind: input, shape index: {}]
  %s8 = inlined_call_operand.<no memory space> [shape: f32[1,1], index: 8, kind: input, shape index: {}]
  %s9 = inlined_call_operand.hbm [shape: f32[1,8], index: 9, kind: output, shape index: {}]
  %s10 = sld [smem:[#allocation0]]
  $region46: #{tpu_custom_call.1} parent=0
    _
  %s12 = ssub.s32 1, %s10
  %s13 = scalar_select 0, %s12, %s10
  %v14 = vstv %s8
  %15 = vst [vmem:[#allocation2] sm:$0x1] %v14
  $region1: #{tpu_custom_call.1} parent=0
    #allocation3 [shape = 'u8[512]{0}', space=vmem, size = 0x400, scoped, tag = 'output window, operand 0, single buffered']
    #allocation4 [shape = 's32[1]{0}', space=sflag, size = 0x4, scoped, tag = 'scoped memory for tpu_custom_call.1']
    %16 = vsyncpa [#allocation4], 0
    // Predicated region
    $region2: #{tpu_custom_call.1} parent=1 // pred_check
      _
    $region3: #{tpu_custom_call.1} parent=1 // pred_check_branch
      %18 = sbr.rel (0) target = $region5
    $region4: #{tpu_custom_call.1} parent=1 // pred_region
      _
    $region5: #{tpu_custom_call.1} parent=1 // pred_fallthru
      _
    // Predicated region
    $region6: #{tpu_custom_call.1} parent=1 // pred_check
      _
    $region7: #{tpu_custom_call.1} parent=1 // pred_check_branch
      %20 = sbr.rel (0) target = $region9
    $region8: #{tpu_custom_call.1} parent=1 // pred_region
      _
    $region9: #{tpu_custom_call.1} parent=1 // pred_fallthru
      _
    // Predicated region
    $region10: #{tpu_custom_call.1} parent=1 // pred_check
      _
    $region11: #{tpu_custom_call.1} parent=1 // pred_check_branch
      %22 = sbr.rel (0) target = $region13
    $region12: #{tpu_custom_call.1} parent=1 // pred_region
      _
    $region13: #{tpu_custom_call.1} parent=1 // pred_fallthru
      _
    // Predicated region
    $region14: #{tpu_custom_call.1} parent=1 // pred_check
      _
    $region15: #{tpu_custom_call.1} parent=1 // pred_check_branch
      %24 = sbr.rel (0) target = $region17
    $region16: #{tpu_custom_call.1} parent=1 // pred_region
      _
    $region17: #{tpu_custom_call.1} parent=1 // pred_fallthru
      _
    // Predicated region
    $region18: #{tpu_custom_call.1} parent=1 // pred_check
      _
    $region19: #{tpu_custom_call.1} parent=1 // pred_check_branch
      %26 = sbr.rel (0) target = $region21
    $region20: #{tpu_custom_call.1} parent=1 // pred_region
      _
    $region21: #{tpu_custom_call.1} parent=1 // pred_fallthru
      _
    // Predicated region
    $region22: #{tpu_custom_call.1} parent=1 // pred_check
      _
    $region23: #{tpu_custom_call.1} parent=1 // pred_check_branch
      %28 = sbr.rel (0) target = $region25
    $region24: #{tpu_custom_call.1} parent=1 // pred_region
      _
    $region25: #{tpu_custom_call.1} parent=1 // pred_fallthru
      _
    // Predicated region
    $region26: #{tpu_custom_call.1} parent=1 // pred_check
      _
    $region27: #{tpu_custom_call.1} parent=1 // pred_check_branch
      %30 = sbr.rel (0) target = $region29
    $region28: #{tpu_custom_call.1} parent=1 // pred_region
      _
    $region29: #{tpu_custom_call.1} parent=1 // pred_fallthru
      _
    // Predicated region
    $region30: #{tpu_custom_call.1} parent=1 // pred_check
      _
    $region31: #{tpu_custom_call.1} parent=1 // pred_check_branch
      %32 = sbr.rel (0) target = $region33
    $region32: #{tpu_custom_call.1} parent=1 // pred_region
      _
    $region33: #{tpu_custom_call.1} parent=1 // pred_fallthru
      _
    // Predicated region
    $region34: #{tpu_custom_call.1} parent=1 // pred_check
      _
    $region35: #{tpu_custom_call.1} parent=1 // pred_check_branch
      %34 = sbr.rel (0) target = $region37
    $region36: #{tpu_custom_call.1} parent=1 // pred_region
      _
    $region37: #{tpu_custom_call.1} parent=1 // pred_fallthru
      _
    %v35 = vld [vmem:[%s0] sm:$0xff]
    %v36 = vld [vmem:[%s0 + $0x8] sm:$0xff]
    %v37 = vld [vmem:[%s0 + $0x10] sm:$0xff]
    %v38 = vld [vmem:[%s0 + $0x18] sm:$0xff]
    %v39 = vld [vmem:[%s0 + $0x20] sm:$0xff]
    %v40 = vld [vmem:[%s0 + $0x28] sm:$0xff]
    %v41 = vld [vmem:[%s0 + $0x30] sm:$0xff]
    %v42 = vld [vmem:[%s0 + $0x38] sm:$0xff]
    %v43 = vld [vmem:[%s0 + $0x40] sm:$0xff]
    %v44 = vld [vmem:[%s0 + $0x48] sm:$0xff]
    %v45 = vld [vmem:[%s0 + $0x50] sm:$0xff]
    %v46 = vld [vmem:[%s0 + $0x58] sm:$0xff]
    %v47 = vld [vmem:[%s0 + $0x60] sm:$0xff]
    %v48 = vld [vmem:[%s0 + $0x68] sm:$0xff]
    %v49 = vld [vmem:[%s0 + $0x70] sm:$0xff]
    %v50 = vld [vmem:[%s0 + $0x78] sm:$0xff]
    %v51 = vld [vmem:[%s0 + $0x80] sm:$0xff]
    %v52 = vld [vmem:[%s0 + $0x88] sm:$0xff]
    %v53 = vld [vmem:[%s0 + $0x90] sm:$0xff]
    %v54 = vld [vmem:[%s0 + $0x98] sm:$0xff]
    %v55 = vld [vmem:[%s0 + $0xa0] sm:$0xff]
    %v56 = vld [vmem:[%s0 + $0xa8] sm:$0xff]
    %v57 = vld [vmem:[%s0 + $0xb0] sm:$0xff]
    %v58 = vld [vmem:[%s0 + $0xb8] sm:$0xff]
    %v59 = vld [vmem:[%s1] sm:$0xff]
    %v60 = vld [vmem:[%s1 + $0x8] sm:$0xff]
    %v61 = vld [vmem:[%s1 + $0x10] sm:$0xff]
    %v62 = vld [vmem:[%s1 + $0x18] sm:$0xff]
    %v63 = vld [vmem:[%s1 + $0x20] sm:$0xff]
    %v64 = vld [vmem:[%s1 + $0x28] sm:$0xff]
    %v65 = vld [vmem:[%s1 + $0x30] sm:$0xff]
    %v66 = vld [vmem:[%s1 + $0x38] sm:$0xff]
    %v67 = vld [vmem:[%s1 + $0x40] sm:$0xff]
    %v68 = vld [vmem:[%s1 + $0x48] sm:$0xff]
    %v69 = vld [vmem:[%s1 + $0x50] sm:$0xff]
    %v70 = vld [vmem:[%s1 + $0x58] sm:$0xff]
    %v71 = vld [vmem:[%s1 + $0x60] sm:$0xff]
    %v72 = vld [vmem:[%s1 + $0x68] sm:$0xff]
    %v73 = vld [vmem:[%s1 + $0x70] sm:$0xff]
    %v74 = vld [vmem:[%s1 + $0x78] sm:$0xff]
    %v75 = vld [vmem:[%s1 + $0x80] sm:$0xff]
    %v76 = vld [vmem:[%s1 + $0x88] sm:$0xff]
    %v77 = vld [vmem:[%s1 + $0x90] sm:$0xff]
    %v78 = vld [vmem:[%s1 + $0x98] sm:$0xff]
    %v79 = vld [vmem:[%s1 + $0xa0] sm:$0xff]
    %v80 = vld [vmem:[%s1 + $0xa8] sm:$0xff]
    %v81 = vld [vmem:[%s1 + $0xb0] sm:$0xff]
    %v82 = vld [vmem:[%s1 + $0xb8] sm:$0xff]
    %v83 = vld [vmem:[%s1 + $0xc0] sm:$0xff]
    %v84 = vld [vmem:[%s1 + $0xc8] sm:$0xff]
    %v85 = vld [vmem:[%s1 + $0xd0] sm:$0xff]
    %v86 = vld [vmem:[%s1 + $0xd8] sm:$0xff]
    %v87 = vld [vmem:[%s1 + $0xe0] sm:$0xff]
    %v88 = vld [vmem:[%s1 + $0xe8] sm:$0xff]
    %v89 = vld [vmem:[%s1 + $0xf0] sm:$0xff]
    %v90 = vld [vmem:[%s1 + $0xf8] sm:$0xff]
    %v91 = vld [vmem:[%s1 + $0x100] sm:$0xff]
    %v92 = vld [vmem:[%s1 + $0x108] sm:$0xff]
    %v93 = vld [vmem:[%s1 + $0x110] sm:$0xff]
    %v94 = vld [vmem:[%s1 + $0x118] sm:$0xff]
    %v95 = vld [vmem:[%s1 + $0x120] sm:$0xff]
    %v96 = vld [vmem:[%s1 + $0x128] sm:$0xff]
    %v97 = vld [vmem:[%s1 + $0x130] sm:$0xff]
    %v98 = vld [vmem:[%s1 + $0x138] sm:$0xff]
    %v99 = vld [vmem:[%s1 + $0x140] sm:$0xff]
    %v100 = vld [vmem:[%s1 + $0x148] sm:$0xff]
    %v101 = vld [vmem:[%s1 + $0x150] sm:$0xff]
    %v102 = vld [vmem:[%s1 + $0x158] sm:$0xff]
    %v103 = vld [vmem:[%s1 + $0x160] sm:$0xff]
    %v104 = vld [vmem:[%s1 + $0x168] sm:$0xff]
    %v105 = vld [vmem:[%s1 + $0x170] sm:$0xff]
    %v106 = vld [vmem:[%s1 + $0x178] sm:$0xff]
    %v107 = vld [vmem:[%s1 + $0x180] sm:$0xff]
    %v108 = vld [vmem:[%s1 + $0x188] sm:$0xff]
    %v109 = vld [vmem:[%s1 + $0x190] sm:$0xff]
    %v110 = vld [vmem:[%s1 + $0x198] sm:$0xff]
    %v111 = vld [vmem:[%s1 + $0x1a0] sm:$0xff]
    %v112 = vld [vmem:[%s1 + $0x1a8] sm:$0xff]
    %v113 = vld [vmem:[%s1 + $0x1b0] sm:$0xff]
    %v114 = vld [vmem:[%s1 + $0x1b8] sm:$0xff]
    %v115 = vld [vmem:[%s1 + $0x1c0] sm:$0xff]
    %v116 = vld [vmem:[%s1 + $0x1c8] sm:$0xff]
    %v117 = vld [vmem:[%s1 + $0x1d0] sm:$0xff]
    %v118 = vld [vmem:[%s1 + $0x1d8] sm:$0xff]
    %v119 = vld [vmem:[%s1 + $0x1e0] sm:$0xff]
    %v120 = vld [vmem:[%s1 + $0x1e8] sm:$0xff]
    %v121 = vld [vmem:[%s1 + $0x1f0] sm:$0xff]
    %v122 = vld [vmem:[%s1 + $0x1f8] sm:$0xff]
    %v123 = vld [vmem:[%s1 + $0x200] sm:$0xff]
    %v124 = vld [vmem:[%s1 + $0x208] sm:$0xff]
    %v125 = vld [vmem:[%s1 + $0x210] sm:$0xff]
    %v126 = vld [vmem:[%s1 + $0x218] sm:$0xff]
    %v127 = vld [vmem:[%s1 + $0x220] sm:$0xff]
    %v128 = vld [vmem:[%s1 + $0x228] sm:$0xff]
    %v129 = vld [vmem:[%s1 + $0x230] sm:$0xff]
    %v130 = vld [vmem:[%s1 + $0x238] sm:$0xff]
    %v131 = vld [vmem:[%s1 + $0x240] sm:$0xff]
    %v132 = vld [vmem:[%s1 + $0x248] sm:$0xff]
    %v133 = vld [vmem:[%s1 + $0x250] sm:$0xff]
    %v134 = vld [vmem:[%s1 + $0x258] sm:$0xff]
    %v135 = vld [vmem:[%s1 + $0x260] sm:$0xff]
    %v136 = vld [vmem:[%s1 + $0x268] sm:$0xff]
    %v137 = vld [vmem:[%s1 + $0x270] sm:$0xff]
    %v138 = vld [vmem:[%s1 + $0x278] sm:$0xff]
    %v139 = vld [vmem:[%s1 + $0x280] sm:$0xff]
    %v140 = vld [vmem:[%s1 + $0x288] sm:$0xff]
    %v141 = vld [vmem:[%s1 + $0x290] sm:$0xff]
    %v142 = vld [vmem:[%s1 + $0x298] sm:$0xff]
    %v143 = vld [vmem:[%s1 + $0x2a0] sm:$0xff]
    %v144 = vld [vmem:[%s1 + $0x2a8] sm:$0xff]
    %v145 = vld [vmem:[%s1 + $0x2b0] sm:$0xff]
    %v146 = vld [vmem:[%s1 + $0x2b8] sm:$0xff]
    %v147 = vld [vmem:[%s1 + $0x2c0] sm:$0xff]
    %v148 = vld [vmem:[%s1 + $0x2c8] sm:$0xff]
    %v149 = vld [vmem:[%s1 + $0x2d0] sm:$0xff]
    %v150 = vld [vmem:[%s1 + $0x2d8] sm:$0xff]
    %v151 = vld [vmem:[%s1 + $0x2e0] sm:$0xff]
    %v152 = vld [vmem:[%s1 + $0x2e8] sm:$0xff]
    %v153 = vld [vmem:[%s1 + $0x2f0] sm:$0xff]
    %v154 = vld [vmem:[%s1 + $0x2f8] sm:$0xff]
    %v155 = vld [vmem:[%s1 + $0x300] sm:$0xff]
    %v156 = vld [vmem:[%s1 + $0x308] sm:$0xff]
    %v157 = vld [vmem:[%s1 + $0x310] sm:$0xff]
    %v158 = vld [vmem:[%s1 + $0x318] sm:$0xff]
    %v159 = vld [vmem:[%s1 + $0x320] sm:$0xff]
    %v160 = vld [vmem:[%s1 + $0x328] sm:$0xff]
    %v161 = vld [vmem:[%s1 + $0x330] sm:$0xff]
    %v162 = vld [vmem:[%s1 + $0x338] sm:$0xff]
    %v163 = vld [vmem:[%s1 + $0x340] sm:$0xff]
    %v164 = vld [vmem:[%s1 + $0x348] sm:$0xff]
    %v165 = vld [vmem:[%s1 + $0x350] sm:$0xff]
    %v166 = vld [vmem:[%s1 + $0x358] sm:$0xff]
    %v167 = vld [vmem:[%s1 + $0x360] sm:$0xff]
    %v168 = vld [vmem:[%s1 + $0x368] sm:$0xff]
    %v169 = vld [vmem:[%s1 + $0x370] sm:$0xff]
    %v170 = vld [vmem:[%s1 + $0x378] sm:$0xff]
    %v171 = vld [vmem:[%s1 + $0x380] sm:$0xff]
    %v172 = vld [vmem:[%s1 + $0x388] sm:$0xff]
    %v173 = vld [vmem:[%s1 + $0x390] sm:$0xff]
    %v174 = vld [vmem:[%s1 + $0x398] sm:$0xff]
    %v175 = vld [vmem:[%s1 + $0x3a0] sm:$0xff]
    %v176 = vld [vmem:[%s1 + $0x3a8] sm:$0xff]
    %v177 = vld [vmem:[%s1 + $0x3b0] sm:$0xff]
    %v178 = vld [vmem:[%s1 + $0x3b8] sm:$0xff]
    %v179 = vld [vmem:[%s1 + $0x3c0] sm:$0xff]
    %v180 = vld [vmem:[%s1 + $0x3c8] sm:$0xff]
    %v181 = vld [vmem:[%s1 + $0x3d0] sm:$0xff]
    %v182 = vld [vmem:[%s1 + $0x3d8] sm:$0xff]
    %v183 = vld [vmem:[%s1 + $0x3e0] sm:$0xff]
    %v184 = vld [vmem:[%s1 + $0x3e8] sm:$0xff]
    %v185 = vld [vmem:[%s1 + $0x3f0] sm:$0xff]
    %v186 = vld [vmem:[%s1 + $0x3f8] sm:$0xff]
    %v187 = vld [vmem:[%s1 + $0x400] sm:$0xff]
    %v188 = vld [vmem:[%s1 + $0x408] sm:$0xff]
    %v189 = vld [vmem:[%s1 + $0x410] sm:$0xff]
    %v190 = vld [vmem:[%s1 + $0x418] sm:$0xff]
    %v191 = vld [vmem:[%s1 + $0x420] sm:$0xff]
    %v192 = vld [vmem:[%s1 + $0x428] sm:$0xff]
    %v193 = vld [vmem:[%s1 + $0x430] sm:$0xff]
    %v194 = vld [vmem:[%s1 + $0x438] sm:$0xff]
    %v195 = vld [vmem:[%s1 + $0x440] sm:$0xff]
    %v196 = vld [vmem:[%s1 + $0x448] sm:$0xff]
    %v197 = vld [vmem:[%s1 + $0x450] sm:$0xff]
    %v198 = vld [vmem:[%s1 + $0x458] sm:$0xff]
    %v199 = vld [vmem:[%s1 + $0x460] sm:$0xff]
    %v200 = vld [vmem:[%s1 + $0x468] sm:$0xff]
    %v201 = vld [vmem:[%s1 + $0x470] sm:$0xff]
    %v202 = vld [vmem:[%s1 + $0x478] sm:$0xff]
    %v203 = vld [vmem:[%s1 + $0x480] sm:$0xff]
    %v204 = vld [vmem:[%s1 + $0x488] sm:$0xff]
    %v205 = vld [vmem:[%s1 + $0x490] sm:$0xff]
    %v206 = vld [vmem:[%s1 + $0x498] sm:$0xff]
    %v207 = vld [vmem:[%s1 + $0x4a0] sm:$0xff]
    %v208 = vld [vmem:[%s1 + $0x4a8] sm:$0xff]
    %v209 = vld [vmem:[%s1 + $0x4b0] sm:$0xff]
    %v210 = vld [vmem:[%s1 + $0x4b8] sm:$0xff]
    %v211 = vld [vmem:[%s1 + $0x4c0] sm:$0xff]
    %v212 = vld [vmem:[%s1 + $0x4c8] sm:$0xff]
    %v213 = vld [vmem:[%s1 + $0x4d0] sm:$0xff]
    %v214 = vld [vmem:[%s1 + $0x4d8] sm:$0xff]
    %v215 = vld [vmem:[%s1 + $0x4e0] sm:$0xff]
    %v216 = vld [vmem:[%s1 + $0x4e8] sm:$0xff]
    %v217 = vld [vmem:[%s1 + $0x4f0] sm:$0xff]
    %v218 = vld [vmem:[%s1 + $0x4f8] sm:$0xff]
    %v219 = vld [vmem:[%s1 + $0x500] sm:$0xff]
    %v220 = vld [vmem:[%s1 + $0x508] sm:$0xff]
    %v221 = vld [vmem:[%s1 + $0x510] sm:$0xff]
    %v222 = vld [vmem:[%s1 + $0x518] sm:$0xff]
    %v223 = vld [vmem:[%s1 + $0x520] sm:$0xff]
    %v224 = vld [vmem:[%s1 + $0x528] sm:$0xff]
    %v225 = vld [vmem:[%s1 + $0x530] sm:$0xff]
    %v226 = vld [vmem:[%s1 + $0x538] sm:$0xff]
    %v227 = vld [vmem:[%s1 + $0x540] sm:$0xff]
    %v228 = vld [vmem:[%s1 + $0x548] sm:$0xff]
    %v229 = vld [vmem:[%s1 + $0x550] sm:$0xff]
    %v230 = vld [vmem:[%s1 + $0x558] sm:$0xff]
    %v231 = vld [vmem:[%s1 + $0x560] sm:$0xff]
    %v232 = vld [vmem:[%s1 + $0x568] sm:$0xff]
    %v233 = vld [vmem:[%s1 + $0x570] sm:$0xff]
    %v234 = vld [vmem:[%s1 + $0x578] sm:$0xff]
    %v235 = vld [vmem:[%s1 + $0x580] sm:$0xff]
    %v236 = vld [vmem:[%s1 + $0x588] sm:$0xff]
    %v237 = vld [vmem:[%s1 + $0x590] sm:$0xff]
    %v238 = vld [vmem:[%s1 + $0x598] sm:$0xff]
    %v239 = vld [vmem:[%s1 + $0x5a0] sm:$0xff]
    %v240 = vld [vmem:[%s1 + $0x5a8] sm:$0xff]
    %v241 = vld [vmem:[%s1 + $0x5b0] sm:$0xff]
    %v242 = vld [vmem:[%s1 + $0x5b8] sm:$0xff]
    %v243 = vld [vmem:[%s1 + $0x5c0] sm:$0xff]
    %v244 = vld [vmem:[%s1 + $0x5c8] sm:$0xff]
    %v245 = vld [vmem:[%s1 + $0x5d0] sm:$0xff]
    %v246 = vld [vmem:[%s1 + $0x5d8] sm:$0xff]
    %v247 = vld [vmem:[%s1 + $0x5e0] sm:$0xff]
    %v248 = vld [vmem:[%s1 + $0x5e8] sm:$0xff]
    %v249 = vld [vmem:[%s1 + $0x5f0] sm:$0xff]
    %v250 = vld [vmem:[%s1 + $0x5f8] sm:$0xff]
    %v251 = vld [vmem:[%s1 + $0x600] sm:$0xff]
    %v252 = vld [vmem:[%s1 + $0x608] sm:$0xff]
    %v253 = vld [vmem:[%s1 + $0x610] sm:$0xff]
    %v254 = vld [vmem:[%s1 + $0x618] sm:$0xff]
    %v255 = vld [vmem:[%s1 + $0x620] sm:$0xff]
    %v256 = vld [vmem:[%s1 + $0x628] sm:$0xff]
    %v257 = vld [vmem:[%s1 + $0x630] sm:$0xff]
    %v258 = vld [vmem:[%s1 + $0x638] sm:$0xff]
    %v259 = vld [vmem:[%s1 + $0x640] sm:$0xff]
    %v260 = vld [vmem:[%s1 + $0x648] sm:$0xff]
    %v261 = vld [vmem:[%s1 + $0x650] sm:$0xff]
    %v262 = vld [vmem:[%s1 + $0x658] sm:$0xff]
    %v263 = vld [vmem:[%s1 + $0x660] sm:$0xff]
    %v264 = vld [vmem:[%s1 + $0x668] sm:$0xff]
    %v265 = vld [vmem:[%s1 + $0x670] sm:$0xff]
    %v266 = vld [vmem:[%s1 + $0x678] sm:$0xff]
    %v267 = vld [vmem:[%s1 + $0x680] sm:$0xff]
    %v268 = vld [vmem:[%s1 + $0x688] sm:$0xff]
    %v269 = vld [vmem:[%s1 + $0x690] sm:$0xff]
    %v270 = vld [vmem:[%s1 + $0x698] sm:$0xff]
    %v271 = vld [vmem:[%s1 + $0x6a0] sm:$0xff]
    %v272 = vld [vmem:[%s1 + $0x6a8] sm:$0xff]
    %v273 = vld [vmem:[%s1 + $0x6b0] sm:$0xff]
    %v274 = vld [vmem:[%s1 + $0x6b8] sm:$0xff]
    %v275 = vld [vmem:[%s1 + $0x6c0] sm:$0xff]
    %v276 = vld [vmem:[%s1 + $0x6c8] sm:$0xff]
    %v277 = vld [vmem:[%s1 + $0x6d0] sm:$0xff]
    %v278 = vld [vmem:[%s1 + $0x6d8] sm:$0xff]
    %v279 = vld [vmem:[%s1 + $0x6e0] sm:$0xff]
    %v280 = vld [vmem:[%s1 + $0x6e8] sm:$0xff]
    %v281 = vld [vmem:[%s1 + $0x6f0] sm:$0xff]
    %v282 = vld [vmem:[%s1 + $0x6f8] sm:$0xff]
    %v283 = vld [vmem:[%s1 + $0x700] sm:$0xff]
    %v284 = vld [vmem:[%s1 + $0x708] sm:$0xff]
    %v285 = vld [vmem:[%s1 + $0x710] sm:$0xff]
    %v286 = vld [vmem:[%s1 + $0x718] sm:$0xff]
    %v287 = vld [vmem:[%s1 + $0x720] sm:$0xff]
    %v288 = vld [vmem:[%s1 + $0x728] sm:$0xff]
    %v289 = vld [vmem:[%s1 + $0x730] sm:$0xff]
    %v290 = vld [vmem:[%s1 + $0x738] sm:$0xff]
    %v291 = vld [vmem:[%s1 + $0x740] sm:$0xff]
    %v292 = vld [vmem:[%s1 + $0x748] sm:$0xff]
    %v293 = vld [vmem:[%s1 + $0x750] sm:$0xff]
    %v294 = vld [vmem:[%s1 + $0x758] sm:$0xff]
    %v295 = vld [vmem:[%s1 + $0x760] sm:$0xff]
    %v296 = vld [vmem:[%s1 + $0x768] sm:$0xff]
    %v297 = vld [vmem:[%s1 + $0x770] sm:$0xff]
    %v298 = vld [vmem:[%s1 + $0x778] sm:$0xff]
    %v299 = vld [vmem:[%s1 + $0x780] sm:$0xff]
    %v300 = vld [vmem:[%s1 + $0x788] sm:$0xff]
    %v301 = vld [vmem:[%s1 + $0x790] sm:$0xff]
    %v302 = vld [vmem:[%s1 + $0x798] sm:$0xff]
    %v303 = vld [vmem:[%s1 + $0x7a0] sm:$0xff]
    %v304 = vld [vmem:[%s1 + $0x7a8] sm:$0xff]
    %v305 = vld [vmem:[%s1 + $0x7b0] sm:$0xff]
    %v306 = vld [vmem:[%s1 + $0x7b8] sm:$0xff]
    %v307 = vld [vmem:[%s1 + $0x7c0] sm:$0xff]
    %v308 = vld [vmem:[%s1 + $0x7c8] sm:$0xff]
    %v309 = vld [vmem:[%s1 + $0x7d0] sm:$0xff]
    %v310 = vld [vmem:[%s1 + $0x7d8] sm:$0xff]
    %v311 = vld [vmem:[%s1 + $0x7e0] sm:$0xff]
    %v312 = vld [vmem:[%s1 + $0x7e8] sm:$0xff]
    %v313 = vld [vmem:[%s1 + $0x7f0] sm:$0xff]
    %v314 = vld [vmem:[%s1 + $0x7f8] sm:$0xff]
    %v315 = vld [vmem:[%s1 + $0x800] sm:$0xff]
    %v316 = vld [vmem:[%s1 + $0x808] sm:$0xff]
    %v317 = vld [vmem:[%s1 + $0x810] sm:$0xff]
    %v318 = vld [vmem:[%s1 + $0x818] sm:$0xff]
    %v319 = vld [vmem:[%s1 + $0x820] sm:$0xff]
    %v320 = vld [vmem:[%s1 + $0x828] sm:$0xff]
    %v321 = vld [vmem:[%s1 + $0x830] sm:$0xff]
    %v322 = vld [vmem:[%s1 + $0x838] sm:$0xff]
    %v323 = vld [vmem:[%s1 + $0x840] sm:$0xff]
    %v324 = vld [vmem:[%s1 + $0x848] sm:$0xff]
    %v325 = vld [vmem:[%s1 + $0x850] sm:$0xff]
    %v326 = vld [vmem:[%s1 + $0x858] sm:$0xff]
    %v327 = vld [vmem:[%s1 + $0x860] sm:$0xff]
    %v328 = vld [vmem:[%s1 + $0x868] sm:$0xff]
    %v329 = vld [vmem:[%s1 + $0x870] sm:$0xff]
    %v330 = vld [vmem:[%s1 + $0x878] sm:$0xff]
    %v331 = vld [vmem:[%s1 + $0x880] sm:$0xff]
    %v332 = vld [vmem:[%s1 + $0x888] sm:$0xff]
    %v333 = vld [vmem:[%s1 + $0x890] sm:$0xff]
    %v334 = vld [vmem:[%s1 + $0x898] sm:$0xff]
    %v335 = vld [vmem:[%s1 + $0x8a0] sm:$0xff]
    %v336 = vld [vmem:[%s1 + $0x8a8] sm:$0xff]
    %v337 = vld [vmem:[%s1 + $0x8b0] sm:$0xff]
    %v338 = vld [vmem:[%s1 + $0x8b8] sm:$0xff]
    %v339 = vld [vmem:[%s1 + $0x8c0] sm:$0xff]
    %v340 = vld [vmem:[%s1 + $0x8c8] sm:$0xff]
    %v341 = vld [vmem:[%s1 + $0x8d0] sm:$0xff]
    %v342 = vld [vmem:[%s1 + $0x8d8] sm:$0xff]
    %v343 = vld [vmem:[%s1 + $0x8e0] sm:$0xff]
    %v344 = vld [vmem:[%s1 + $0x8e8] sm:$0xff]
    %v345 = vld [vmem:[%s1 + $0x8f0] sm:$0xff]
    %v346 = vld [vmem:[%s1 + $0x8f8] sm:$0xff]
    %v347 = vld [vmem:[%s1 + $0x900] sm:$0xff]
    %v348 = vld [vmem:[%s1 + $0x908] sm:$0xff]
    %v349 = vld [vmem:[%s1 + $0x910] sm:$0xff]
    %v350 = vld [vmem:[%s1 + $0x918] sm:$0xff]
    %v351 = vld [vmem:[%s1 + $0x920] sm:$0xff]
    %v352 = vld [vmem:[%s1 + $0x928] sm:$0xff]
    %v353 = vld [vmem:[%s1 + $0x930] sm:$0xff]
    %v354 = vld [vmem:[%s1 + $0x938] sm:$0xff]
    %v355 = vld [vmem:[%s1 + $0x940] sm:$0xff]
    %v356 = vld [vmem:[%s1 + $0x948] sm:$0xff]
    %v357 = vld [vmem:[%s1 + $0x950] sm:$0xff]
    %v358 = vld [vmem:[%s1 + $0x958] sm:$0xff]
    %v359 = vld [vmem:[%s1 + $0x960] sm:$0xff]
    %v360 = vld [vmem:[%s1 + $0x968] sm:$0xff]
    %v361 = vld [vmem:[%s1 + $0x970] sm:$0xff]
    %v362 = vld [vmem:[%s1 + $0x978] sm:$0xff]
    %v363 = vld [vmem:[%s1 + $0x980] sm:$0xff]
    %v364 = vld [vmem:[%s1 + $0x988] sm:$0xff]
    %v365 = vld [vmem:[%s1 + $0x990] sm:$0xff]
    %v366 = vld [vmem:[%s1 + $0x998] sm:$0xff]
    %v367 = vld [vmem:[%s1 + $0x9a0] sm:$0xff]
    %v368 = vld [vmem:[%s1 + $0x9a8] sm:$0xff]
    %v369 = vld [vmem:[%s1 + $0x9b0] sm:$0xff]
    %v370 = vld [vmem:[%s1 + $0x9b8] sm:$0xff]
    %v371 = vld [vmem:[%s1 + $0x9c0] sm:$0xff]
    %v372 = vld [vmem:[%s1 + $0x9c8] sm:$0xff]
    %v373 = vld [vmem:[%s1 + $0x9d0] sm:$0xff]
    %v374 = vld [vmem:[%s1 + $0x9d8] sm:$0xff]
    %v375 = vld [vmem:[%s1 + $0x9e0] sm:$0xff]
    %v376 = vld [vmem:[%s1 + $0x9e8] sm:$0xff]
    %v377 = vld [vmem:[%s1 + $0x9f0] sm:$0xff]
    %v378 = vld [vmem:[%s1 + $0x9f8] sm:$0xff]
    %v379 = vld [vmem:[%s1 + $0xa00] sm:$0xff]
    %v380 = vld [vmem:[%s1 + $0xa08] sm:$0xff]
    %v381 = vld [vmem:[%s1 + $0xa10] sm:$0xff]
    %v382 = vld [vmem:[%s1 + $0xa18] sm:$0xff]
    %v383 = vld [vmem:[%s1 + $0xa20] sm:$0xff]
    %v384 = vld [vmem:[%s1 + $0xa28] sm:$0xff]
    %v385 = vld [vmem:[%s1 + $0xa30] sm:$0xff]
    %v386 = vld [vmem:[%s1 + $0xa38] sm:$0xff]
    %v387 = vld [vmem:[%s1 + $0xa40] sm:$0xff]
    %v388 = vld [vmem:[%s1 + $0xa48] sm:$0xff]
    %v389 = vld [vmem:[%s1 + $0xa50] sm:$0xff]
    %v390 = vld [vmem:[%s1 + $0xa58] sm:$0xff]
    %v391 = vld [vmem:[%s1 + $0xa60] sm:$0xff]
    %v392 = vld [vmem:[%s1 + $0xa68] sm:$0xff]
    %v393 = vld [vmem:[%s1 + $0xa70] sm:$0xff]
    %v394 = vld [vmem:[%s1 + $0xa78] sm:$0xff]
    %v395 = vld [vmem:[%s1 + $0xa80] sm:$0xff]
    %v396 = vld [vmem:[%s1 + $0xa88] sm:$0xff]
    %v397 = vld [vmem:[%s1 + $0xa90] sm:$0xff]
    %v398 = vld [vmem:[%s1 + $0xa98] sm:$0xff]
    %v399 = vld [vmem:[%s1 + $0xaa0] sm:$0xff]
    %v400 = vld [vmem:[%s1 + $0xaa8] sm:$0xff]
    %v401 = vld [vmem:[%s1 + $0xab0] sm:$0xff]
    %v402 = vld [vmem:[%s1 + $0xab8] sm:$0xff]
    %v403 = vld [vmem:[%s1 + $0xac0] sm:$0xff]
    %v404 = vld [vmem:[%s1 + $0xac8] sm:$0xff]
    %v405 = vld [vmem:[%s1 + $0xad0] sm:$0xff]
    %v406 = vld [vmem:[%s1 + $0xad8] sm:$0xff]
    %v407 = vld [vmem:[%s1 + $0xae0] sm:$0xff]
    %v408 = vld [vmem:[%s1 + $0xae8] sm:$0xff]
    %v409 = vld [vmem:[%s1 + $0xaf0] sm:$0xff]
    %v410 = vld [vmem:[%s1 + $0xaf8] sm:$0xff]
    %v411 = vld [vmem:[%s1 + $0xb00] sm:$0xff]
    %v412 = vld [vmem:[%s1 + $0xb08] sm:$0xff]
    %v413 = vld [vmem:[%s1 + $0xb10] sm:$0xff]
    %v414 = vld [vmem:[%s1 + $0xb18] sm:$0xff]
    %v415 = vld [vmem:[%s1 + $0xb20] sm:$0xff]
    %v416 = vld [vmem:[%s1 + $0xb28] sm:$0xff]
    %v417 = vld [vmem:[%s1 + $0xb30] sm:$0xff]
    %v418 = vld [vmem:[%s1 + $0xb38] sm:$0xff]
    %v419 = vld [vmem:[%s1 + $0xb40] sm:$0xff]
    %v420 = vld [vmem:[%s1 + $0xb48] sm:$0xff]
    %v421 = vld [vmem:[%s1 + $0xb50] sm:$0xff]
    %v422 = vld [vmem:[%s1 + $0xb58] sm:$0xff]
    %v423 = vld [vmem:[%s1 + $0xb60] sm:$0xff]
    %v424 = vld [vmem:[%s1 + $0xb68] sm:$0xff]
    %v425 = vld [vmem:[%s1 + $0xb70] sm:$0xff]
    %v426 = vld [vmem:[%s1 + $0xb78] sm:$0xff]
    %v427 = vld [vmem:[%s1 + $0xb80] sm:$0xff]
    %v428 = vld [vmem:[%s1 + $0xb88] sm:$0xff]
    %v429 = vld [vmem:[%s1 + $0xb90] sm:$0xff]
    %v430 = vld [vmem:[%s1 + $0xb98] sm:$0xff]
    %v431 = vld [vmem:[%s1 + $0xba0] sm:$0xff]
    %v432 = vld [vmem:[%s1 + $0xba8] sm:$0xff]
    %v433 = vld [vmem:[%s1 + $0xbb0] sm:$0xff]
    %v434 = vld [vmem:[%s2] sm:$0x1]
    %v436 = vlaneseq
    %v437 = vshrl.u32 %v436, 7
    %v438 = vsub.s32 0, %v437
    %v439 = vrot.slane %v434, %v438
    %vm441 = vcmask 457728
    %v443 = vsel %vm441, %v58, 0
    %445 = vmatprep.subr.mxu0 0.0
    %446 = vmatpush1.msra.mxu0 %v74
    %447 = vmatprep.subr.mxu0 0.0
    %448 = vmatpush1.msra.mxu0 %v73
    %449 = vmatprep.subr.mxu0 0.0
    %450 = vmatpush1.msra.mxu0 %v72
    %451 = vmatprep.subr.mxu0 0.0
    %452 = vmatpush1.msra.mxu0 %v71
    %453 = vmatprep.subr.mxu0 0.0
    %454 = vmatpush1.msra.mxu0 %v70
    %455 = vmatprep.subr.mxu0 0.0
    %456 = vmatpush1.msra.mxu0 %v69
    %457 = vmatprep.subr.mxu0 0.0
    %458 = vmatpush1.msra.mxu0 %v68
    %459 = vmatprep.subr.mxu0 0.0
    %460 = vmatpush1.msra.mxu0 %v67
    %461 = vmatprep.subr.mxu0 0.0
    %462 = vmatpush1.msra.mxu0 %v66
    %463 = vmatprep.subr.mxu0 0.0
    %464 = vmatpush1.msra.mxu0 %v65
    %465 = vmatprep.subr.mxu0 0.0
    %466 = vmatpush1.msra.mxu0 %v64
    %467 = vmatprep.subr.mxu0 0.0
    %468 = vmatpush1.msra.mxu0 %v63
    %469 = vmatprep.subr.mxu0 0.0
    %470 = vmatpush1.msra.mxu0 %v62
    %471 = vmatprep.subr.mxu0 0.0
    %472 = vmatpush1.msra.mxu0 %v61
    %473 = vmatprep.subr.mxu0 0.0
    %474 = vmatpush1.msra.mxu0 %v60
    %475 = vmatprep.subr.mxu0 0.0
    %476 = vmatpush1.msra.mxu0 %v59
    %477 = vmatprep.subr.mxu0 0.0
    %478 = vmatpush2.msra.mxu0 %v90
    %479 = vmatprep.subr.mxu0 0.0
    %480 = vmatpush2.msra.mxu0 %v89
    %481 = vmatprep.subr.mxu0 0.0
    %482 = vmatpush2.msra.mxu0 %v88
    %483 = vmatprep.subr.mxu0 0.0
    %484 = vmatpush2.msra.mxu0 %v87
    %485 = vmatprep.subr.mxu0 0.0
    %486 = vmatpush2.msra.mxu0 %v86
    %487 = vmatprep.subr.mxu0 0.0
    %488 = vmatpush2.msra.mxu0 %v85
    %489 = vmatprep.subr.mxu0 0.0
    %490 = vmatpush2.msra.mxu0 %v84
    %491 = vmatprep.subr.mxu0 0.0
    %492 = vmatpush2.msra.mxu0 %v83
    %493 = vmatprep.subr.mxu0 0.0
    %494 = vmatpush2.msra.mxu0 %v82
    %495 = vmatprep.subr.mxu0 0.0
    %496 = vmatpush2.msra.mxu0 %v81
    %497 = vmatprep.subr.mxu0 0.0
    %498 = vmatpush2.msra.mxu0 %v80
    %499 = vmatprep.subr.mxu0 0.0
    %500 = vmatpush2.msra.mxu0 %v79
    %501 = vmatprep.subr.mxu0 0.0
    %502 = vmatpush2.msra.mxu0 %v78
    %503 = vmatprep.subr.mxu0 0.0
    %504 = vmatpush2.msra.mxu0 %v77
    %505 = vmatprep.subr.mxu0 0.0
    %506 = vmatpush2.msra.mxu0 %v76
    %507 = vmatprep.subr.mxu0 0.0
    %508 = vmatpush2.msra.mxu0 %v75
    %509 = vmatprep.mubr.f32.mxu0 %v36
    %510 = vmatmul.mubr.f32.gmra.mxu0 %v35
    %v511 = vpop.f32.mrf.mxu0
    %v512 = vadd.f32 %v439, %v511
    %v513 = vpop.f32.mrf.mxu0
    %514 = vdwg.mxu0
    %515 = vmatprep.subr.mxu0 0.0
    %516 = vmatpush1.msra.mxu0 %v106
    %517 = vmatprep.subr.mxu0 0.0
    %518 = vmatpush1.msra.mxu0 %v105
    %519 = vmatprep.subr.mxu0 0.0
    %520 = vmatpush1.msra.mxu0 %v104
    %521 = vmatprep.subr.mxu0 0.0
    %522 = vmatpush1.msra.mxu0 %v103
    %523 = vmatprep.subr.mxu0 0.0
    %524 = vmatpush1.msra.mxu0 %v102
    %525 = vmatprep.subr.mxu0 0.0
    %526 = vmatpush1.msra.mxu0 %v101
    %527 = vmatprep.subr.mxu0 0.0
    %528 = vmatpush1.msra.mxu0 %v100
    %529 = vmatprep.subr.mxu0 0.0
    %530 = vmatpush1.msra.mxu0 %v99
    %531 = vmatprep.subr.mxu0 0.0
    %532 = vmatpush1.msra.mxu0 %v98
    %533 = vmatprep.subr.mxu0 0.0
    %534 = vmatpush1.msra.mxu0 %v97
    %535 = vmatprep.subr.mxu0 0.0
    %536 = vmatpush1.msra.mxu0 %v96
    %537 = vmatprep.subr.mxu0 0.0
    %538 = vmatpush1.msra.mxu0 %v95
    %539 = vmatprep.subr.mxu0 0.0
    %540 = vmatpush1.msra.mxu0 %v94
    %541 = vmatprep.subr.mxu0 0.0
    %542 = vmatpush1.msra.mxu0 %v93
    %543 = vmatprep.subr.mxu0 0.0
    %544 = vmatpush1.msra.mxu0 %v92
    %545 = vmatprep.subr.mxu0 0.0
    %546 = vmatpush1.msra.mxu0 %v91
    %547 = vmatprep.subr.mxu0 0.0
    %548 = vmatpush2.msra.mxu0 %v122
    %549 = vmatprep.subr.mxu0 0.0
    %550 = vmatpush2.msra.mxu0 %v121
    %551 = vmatprep.subr.mxu0 0.0
    %552 = vmatpush2.msra.mxu0 %v120
    %553 = vmatprep.subr.mxu0 0.0
    %554 = vmatpush2.msra.mxu0 %v119
    %555 = vmatprep.subr.mxu0 0.0
    %556 = vmatpush2.msra.mxu0 %v118
    %557 = vmatprep.subr.mxu0 0.0
    %558 = vmatpush2.msra.mxu0 %v117
    %559 = vmatprep.subr.mxu0 0.0
    %560 = vmatpush2.msra.mxu0 %v116
    %561 = vmatprep.subr.mxu0 0.0
    %562 = vmatpush2.msra.mxu0 %v115
    %563 = vmatprep.subr.mxu0 0.0
    %564 = vmatpush2.msra.mxu0 %v114
    %565 = vmatprep.subr.mxu0 0.0
    %566 = vmatpush2.msra.mxu0 %v113
    %567 = vmatprep.subr.mxu0 0.0
    %568 = vmatpush2.msra.mxu0 %v112
    %569 = vmatprep.subr.mxu0 0.0
    %570 = vmatpush2.msra.mxu0 %v111
    %571 = vmatprep.subr.mxu0 0.0
    %572 = vmatpush2.msra.mxu0 %v110
    %573 = vmatprep.subr.mxu0 0.0
    %574 = vmatpush2.msra.mxu0 %v109
    %575 = vmatprep.subr.mxu0 0.0
    %576 = vmatpush2.msra.mxu0 %v108
    %577 = vmatprep.subr.mxu0 0.0
    %578 = vmatpush2.msra.mxu0 %v107
    %579 = vmatprep.mubr.f32.mxu0 %v38
    %580 = vmatmul.mubr.f32.gmra.mxu0 %v37
    %v581 = vpop.f32.mrf.mxu0
    %v582 = vadd.f32 %v512, %v581
    %v583 = vpop.f32.mrf.mxu0
    %584 = vdwg.mxu0
    %585 = vmatprep.subr.mxu0 0.0
    %586 = vmatpush1.msra.mxu0 %v138
    %587 = vmatprep.subr.mxu0 0.0
    %588 = vmatpush1.msra.mxu0 %v137
    %589 = vmatprep.subr.mxu0 0.0
    %590 = vmatpush1.msra.mxu0 %v136
    %591 = vmatprep.subr.mxu0 0.0
    %592 = vmatpush1.msra.mxu0 %v135
    %593 = vmatprep.subr.mxu0 0.0
    %594 = vmatpush1.msra.mxu0 %v134
    %595 = vmatprep.subr.mxu0 0.0
    %596 = vmatpush1.msra.mxu0 %v133
    %597 = vmatprep.subr.mxu0 0.0
    %598 = vmatpush1.msra.mxu0 %v132
    %599 = vmatprep.subr.mxu0 0.0
    %600 = vmatpush1.msra.mxu0 %v131
    %601 = vmatprep.subr.mxu0 0.0
    %602 = vmatpush1.msra.mxu0 %v130
    %603 = vmatprep.subr.mxu0 0.0
    %604 = vmatpush1.msra.mxu0 %v129
    %605 = vmatprep.subr.mxu0 0.0
    %606 = vmatpush1.msra.mxu0 %v128
    %607 = vmatprep.subr.mxu0 0.0
    %608 = vmatpush1.msra.mxu0 %v127
    %609 = vmatprep.subr.mxu0 0.0
    %610 = vmatpush1.msra.mxu0 %v126
    %611 = vmatprep.subr.mxu0 0.0
    %612 = vmatpush1.msra.mxu0 %v125
    %613 = vmatprep.subr.mxu0 0.0
    %614 = vmatpush1.msra.mxu0 %v124
    %615 = vmatprep.subr.mxu0 0.0
    %616 = vmatpush1.msra.mxu0 %v123
    %617 = vmatprep.subr.mxu0 0.0
    %618 = vmatpush2.msra.mxu0 %v154
    %619 = vmatprep.subr.mxu0 0.0
    %620 = vmatpush2.msra.mxu0 %v153
    %621 = vmatprep.subr.mxu0 0.0
    %622 = vmatpush2.msra.mxu0 %v152
    %623 = vmatprep.subr.mxu0 0.0
    %624 = vmatpush2.msra.mxu0 %v151
    %625 = vmatprep.subr.mxu0 0.0
    %626 = vmatpush2.msra.mxu0 %v150
    %627 = vmatprep.subr.mxu0 0.0
    %628 = vmatpush2.msra.mxu0 %v149
    %629 = vmatprep.subr.mxu0 0.0
    %630 = vmatpush2.msra.mxu0 %v148
    %631 = vmatprep.subr.mxu0 0.0
    %632 = vmatpush2.msra.mxu0 %v147
    %633 = vmatprep.subr.mxu0 0.0
    %634 = vmatpush2.msra.mxu0 %v146
    %635 = vmatprep.subr.mxu0 0.0
    %636 = vmatpush2.msra.mxu0 %v145
    %637 = vmatprep.subr.mxu0 0.0
    %638 = vmatpush2.msra.mxu0 %v144
    %639 = vmatprep.subr.mxu0 0.0
    %640 = vmatpush2.msra.mxu0 %v143
    %641 = vmatprep.subr.mxu0 0.0
    %642 = vmatpush2.msra.mxu0 %v142
    %643 = vmatprep.subr.mxu0 0.0
    %644 = vmatpush2.msra.mxu0 %v141
    %645 = vmatprep.subr.mxu0 0.0
    %646 = vmatpush2.msra.mxu0 %v140
    %647 = vmatprep.subr.mxu0 0.0
    %648 = vmatpush2.msra.mxu0 %v139
    %649 = vmatprep.mubr.f32.mxu0 %v40
    %650 = vmatmul.mubr.f32.gmra.mxu0 %v39
    %v651 = vpop.f32.mrf.mxu0
    %v652 = vadd.f32 %v582, %v651
    %v653 = vpop.f32.mrf.mxu0
    %654 = vdwg.mxu0
    %655 = vmatprep.subr.mxu0 0.0
    %656 = vmatpush1.msra.mxu0 %v170
    %657 = vmatprep.subr.mxu0 0.0
    %658 = vmatpush1.msra.mxu0 %v169
    %659 = vmatprep.subr.mxu0 0.0
    %660 = vmatpush1.msra.mxu0 %v168
    %661 = vmatprep.subr.mxu0 0.0
    %662 = vmatpush1.msra.mxu0 %v167
    %663 = vmatprep.subr.mxu0 0.0
    %664 = vmatpush1.msra.mxu0 %v166
    %665 = vmatprep.subr.mxu0 0.0
    %666 = vmatpush1.msra.mxu0 %v165
    %667 = vmatprep.subr.mxu0 0.0
    %668 = vmatpush1.msra.mxu0 %v164
    %669 = vmatprep.subr.mxu0 0.0
    %670 = vmatpush1.msra.mxu0 %v163
    %671 = vmatprep.subr.mxu0 0.0
    %672 = vmatpush1.msra.mxu0 %v162
    %673 = vmatprep.subr.mxu0 0.0
    %674 = vmatpush1.msra.mxu0 %v161
    %675 = vmatprep.subr.mxu0 0.0
    %676 = vmatpush1.msra.mxu0 %v160
    %677 = vmatprep.subr.mxu0 0.0
    %678 = vmatpush1.msra.mxu0 %v159
    %679 = vmatprep.subr.mxu0 0.0
    %680 = vmatpush1.msra.mxu0 %v158
    %681 = vmatprep.subr.mxu0 0.0
    %682 = vmatpush1.msra.mxu0 %v157
    %683 = vmatprep.subr.mxu0 0.0
    %684 = vmatpush1.msra.mxu0 %v156
    %685 = vmatprep.subr.mxu0 0.0
    %686 = vmatpush1.msra.mxu0 %v155
    %687 = vmatprep.subr.mxu0 0.0
    %688 = vmatpush2.msra.mxu0 %v186
    %689 = vmatprep.subr.mxu0 0.0
    %690 = vmatpush2.msra.mxu0 %v185
    %691 = vmatprep.subr.mxu0 0.0
    %692 = vmatpush2.msra.mxu0 %v184
    %693 = vmatprep.subr.mxu0 0.0
    %694 = vmatpush2.msra.mxu0 %v183
    %695 = vmatprep.subr.mxu0 0.0
    %696 = vmatpush2.msra.mxu0 %v182
    %697 = vmatprep.subr.mxu0 0.0
    %698 = vmatpush2.msra.mxu0 %v181
    %699 = vmatprep.subr.mxu0 0.0
    %700 = vmatpush2.msra.mxu0 %v180
    %701 = vmatprep.subr.mxu0 0.0
    %702 = vmatpush2.msra.mxu0 %v179
    %703 = vmatprep.subr.mxu0 0.0
    %704 = vmatpush2.msra.mxu0 %v178
    %705 = vmatprep.subr.mxu0 0.0
    %706 = vmatpush2.msra.mxu0 %v177
    %707 = vmatprep.subr.mxu0 0.0
    %708 = vmatpush2.msra.mxu0 %v176
    %709 = vmatprep.subr.mxu0 0.0
    %710 = vmatpush2.msra.mxu0 %v175
    %711 = vmatprep.subr.mxu0 0.0
    %712 = vmatpush2.msra.mxu0 %v174
    %713 = vmatprep.subr.mxu0 0.0
    %714 = vmatpush2.msra.mxu0 %v173
    %715 = vmatprep.subr.mxu0 0.0
    %716 = vmatpush2.msra.mxu0 %v172
    %717 = vmatprep.subr.mxu0 0.0
    %718 = vmatpush2.msra.mxu0 %v171
    %719 = vmatprep.mubr.f32.mxu0 %v42
    %720 = vmatmul.mubr.f32.gmra.mxu0 %v41
    %v721 = vpop.f32.mrf.mxu0
    %v722 = vadd.f32 %v652, %v721
    %v723 = vpop.f32.mrf.mxu0
    %724 = vdwg.mxu0
    %725 = vmatprep.subr.mxu0 0.0
    %726 = vmatpush1.msra.mxu0 %v202
    %727 = vmatprep.subr.mxu0 0.0
    %728 = vmatpush1.msra.mxu0 %v201
    %729 = vmatprep.subr.mxu0 0.0
    %730 = vmatpush1.msra.mxu0 %v200
    %731 = vmatprep.subr.mxu0 0.0
    %732 = vmatpush1.msra.mxu0 %v199
    %733 = vmatprep.subr.mxu0 0.0
    %734 = vmatpush1.msra.mxu0 %v198
    %735 = vmatprep.subr.mxu0 0.0
    %736 = vmatpush1.msra.mxu0 %v197
    %737 = vmatprep.subr.mxu0 0.0
    %738 = vmatpush1.msra.mxu0 %v196
    %739 = vmatprep.subr.mxu0 0.0
    %740 = vmatpush1.msra.mxu0 %v195
    %741 = vmatprep.subr.mxu0 0.0
    %742 = vmatpush1.msra.mxu0 %v194
    %743 = vmatprep.subr.mxu0 0.0
    %744 = vmatpush1.msra.mxu0 %v193
    %745 = vmatprep.subr.mxu0 0.0
    %746 = vmatpush1.msra.mxu0 %v192
    %747 = vmatprep.subr.mxu0 0.0
    %748 = vmatpush1.msra.mxu0 %v191
    %749 = vmatprep.subr.mxu0 0.0
    %750 = vmatpush1.msra.mxu0 %v190
    %751 = vmatprep.subr.mxu0 0.0
    %752 = vmatpush1.msra.mxu0 %v189
    %753 = vmatprep.subr.mxu0 0.0
    %754 = vmatpush1.msra.mxu0 %v188
    %755 = vmatprep.subr.mxu0 0.0
    %756 = vmatpush1.msra.mxu0 %v187
    %757 = vmatprep.subr.mxu0 0.0
    %758 = vmatpush2.msra.mxu0 %v218
    %759 = vmatprep.subr.mxu0 0.0
    %760 = vmatpush2.msra.mxu0 %v217
    %761 = vmatprep.subr.mxu0 0.0
    %762 = vmatpush2.msra.mxu0 %v216
    %763 = vmatprep.subr.mxu0 0.0
    %764 = vmatpush2.msra.mxu0 %v215
    %765 = vmatprep.subr.mxu0 0.0
    %766 = vmatpush2.msra.mxu0 %v214
    %767 = vmatprep.subr.mxu0 0.0
    %768 = vmatpush2.msra.mxu0 %v213
    %769 = vmatprep.subr.mxu0 0.0
    %770 = vmatpush2.msra.mxu0 %v212
    %771 = vmatprep.subr.mxu0 0.0
    %772 = vmatpush2.msra.mxu0 %v211
    %773 = vmatprep.subr.mxu0 0.0
    %774 = vmatpush2.msra.mxu0 %v210
    %775 = vmatprep.subr.mxu0 0.0
    %776 = vmatpush2.msra.mxu0 %v209
    %777 = vmatprep.subr.mxu0 0.0
    %778 = vmatpush2.msra.mxu0 %v208
    %779 = vmatprep.subr.mxu0 0.0
    %780 = vmatpush2.msra.mxu0 %v207
    %781 = vmatprep.subr.mxu0 0.0
    %782 = vmatpush2.msra.mxu0 %v206
    %783 = vmatprep.subr.mxu0 0.0
    %784 = vmatpush2.msra.mxu0 %v205
    %785 = vmatprep.subr.mxu0 0.0
    %786 = vmatpush2.msra.mxu0 %v204
    %787 = vmatprep.subr.mxu0 0.0
    %788 = vmatpush2.msra.mxu0 %v203
    %789 = vmatprep.mubr.f32.mxu0 %v44
    %790 = vmatmul.mubr.f32.gmra.mxu0 %v43
    %v791 = vpop.f32.mrf.mxu0
    %v792 = vadd.f32 %v722, %v791
    %v793 = vpop.f32.mrf.mxu0
    %794 = vdwg.mxu0
    %795 = vmatprep.subr.mxu0 0.0
    %796 = vmatpush1.msra.mxu0 %v234
    %797 = vmatprep.subr.mxu0 0.0
    %798 = vmatpush1.msra.mxu0 %v233
    %799 = vmatprep.subr.mxu0 0.0
    %800 = vmatpush1.msra.mxu0 %v232
    %801 = vmatprep.subr.mxu0 0.0
    %802 = vmatpush1.msra.mxu0 %v231
    %803 = vmatprep.subr.mxu0 0.0
    %804 = vmatpush1.msra.mxu0 %v230
    %805 = vmatprep.subr.mxu0 0.0
    %806 = vmatpush1.msra.mxu0 %v229
    %807 = vmatprep.subr.mxu0 0.0
    %808 = vmatpush1.msra.mxu0 %v228
    %809 = vmatprep.subr.mxu0 0.0
    %810 = vmatpush1.msra.mxu0 %v227
    %811 = vmatprep.subr.mxu0 0.0
    %812 = vmatpush1.msra.mxu0 %v226
    %813 = vmatprep.subr.mxu0 0.0
    %814 = vmatpush1.msra.mxu0 %v225
    %815 = vmatprep.subr.mxu0 0.0
    %816 = vmatpush1.msra.mxu0 %v224
    %817 = vmatprep.subr.mxu0 0.0
    %818 = vmatpush1.msra.mxu0 %v223
    %819 = vmatprep.subr.mxu0 0.0
    %820 = vmatpush1.msra.mxu0 %v222
    %821 = vmatprep.subr.mxu0 0.0
    %822 = vmatpush1.msra.mxu0 %v221
    %823 = vmatprep.subr.mxu0 0.0
    %824 = vmatpush1.msra.mxu0 %v220
    %825 = vmatprep.subr.mxu0 0.0
    %826 = vmatpush1.msra.mxu0 %v219
    %827 = vmatprep.subr.mxu0 0.0
    %828 = vmatpush2.msra.mxu0 %v250
    %829 = vmatprep.subr.mxu0 0.0
    %830 = vmatpush2.msra.mxu0 %v249
    %831 = vmatprep.subr.mxu0 0.0
    %832 = vmatpush2.msra.mxu0 %v248
    %833 = vmatprep.subr.mxu0 0.0
    %834 = vmatpush2.msra.mxu0 %v247
    %835 = vmatprep.subr.mxu0 0.0
    %836 = vmatpush2.msra.mxu0 %v246
    %837 = vmatprep.subr.mxu0 0.0
    %838 = vmatpush2.msra.mxu0 %v245
    %839 = vmatprep.subr.mxu0 0.0
    %840 = vmatpush2.msra.mxu0 %v244
    %841 = vmatprep.subr.mxu0 0.0
    %842 = vmatpush2.msra.mxu0 %v243
    %843 = vmatprep.subr.mxu0 0.0
    %844 = vmatpush2.msra.mxu0 %v242
    %845 = vmatprep.subr.mxu0 0.0
    %846 = vmatpush2.msra.mxu0 %v241
    %847 = vmatprep.subr.mxu0 0.0
    %848 = vmatpush2.msra.mxu0 %v240
    %849 = vmatprep.subr.mxu0 0.0
    %850 = vmatpush2.msra.mxu0 %v239
    %851 = vmatprep.subr.mxu0 0.0
    %852 = vmatpush2.msra.mxu0 %v238
    %853 = vmatprep.subr.mxu0 0.0
    %854 = vmatpush2.msra.mxu0 %v237
    %855 = vmatprep.subr.mxu0 0.0
    %856 = vmatpush2.msra.mxu0 %v236
    %857 = vmatprep.subr.mxu0 0.0
    %858 = vmatpush2.msra.mxu0 %v235
    %859 = vmatprep.mubr.f32.mxu0 %v46
    %860 = vmatmul.mubr.f32.gmra.mxu0 %v45
    %v861 = vpop.f32.mrf.mxu0
    %v862 = vadd.f32 %v792, %v861
    %v863 = vpop.f32.mrf.mxu0
    %864 = vdwg.mxu0
    %865 = vmatprep.subr.mxu0 0.0
    %866 = vmatpush1.msra.mxu0 %v266
    %867 = vmatprep.subr.mxu0 0.0
    %868 = vmatpush1.msra.mxu0 %v265
    %869 = vmatprep.subr.mxu0 0.0
    %870 = vmatpush1.msra.mxu0 %v264
    %871 = vmatprep.subr.mxu0 0.0
    %872 = vmatpush1.msra.mxu0 %v263
    %873 = vmatprep.subr.mxu0 0.0
    %874 = vmatpush1.msra.mxu0 %v262
    %875 = vmatprep.subr.mxu0 0.0
    %876 = vmatpush1.msra.mxu0 %v261
    %877 = vmatprep.subr.mxu0 0.0
    %878 = vmatpush1.msra.mxu0 %v260
    %879 = vmatprep.subr.mxu0 0.0
    %880 = vmatpush1.msra.mxu0 %v259
    %881 = vmatprep.subr.mxu0 0.0
    %882 = vmatpush1.msra.mxu0 %v258
    %883 = vmatprep.subr.mxu0 0.0
    %884 = vmatpush1.msra.mxu0 %v257
    %885 = vmatprep.subr.mxu0 0.0
    %886 = vmatpush1.msra.mxu0 %v256
    %887 = vmatprep.subr.mxu0 0.0
    %888 = vmatpush1.msra.mxu0 %v255
    %889 = vmatprep.subr.mxu0 0.0
    %890 = vmatpush1.msra.mxu0 %v254
    %891 = vmatprep.subr.mxu0 0.0
    %892 = vmatpush1.msra.mxu0 %v253
    %893 = vmatprep.subr.mxu0 0.0
    %894 = vmatpush1.msra.mxu0 %v252
    %895 = vmatprep.subr.mxu0 0.0
    %896 = vmatpush1.msra.mxu0 %v251
    %897 = vmatprep.subr.mxu0 0.0
    %898 = vmatpush2.msra.mxu0 %v282
    %899 = vmatprep.subr.mxu0 0.0
    %900 = vmatpush2.msra.mxu0 %v281
    %901 = vmatprep.subr.mxu0 0.0
    %902 = vmatpush2.msra.mxu0 %v280
    %903 = vmatprep.subr.mxu0 0.0
    %904 = vmatpush2.msra.mxu0 %v279
    %905 = vmatprep.subr.mxu0 0.0
    %906 = vmatpush2.msra.mxu0 %v278
    %907 = vmatprep.subr.mxu0 0.0
    %908 = vmatpush2.msra.mxu0 %v277
    %909 = vmatprep.subr.mxu0 0.0
    %910 = vmatpush2.msra.mxu0 %v276
    %911 = vmatprep.subr.mxu0 0.0
    %912 = vmatpush2.msra.mxu0 %v275
    %913 = vmatprep.subr.mxu0 0.0
    %914 = vmatpush2.msra.mxu0 %v274
    %915 = vmatprep.subr.mxu0 0.0
    %916 = vmatpush2.msra.mxu0 %v273
    %917 = vmatprep.subr.mxu0 0.0
    %918 = vmatpush2.msra.mxu0 %v272
    %919 = vmatprep.subr.mxu0 0.0
    %920 = vmatpush2.msra.mxu0 %v271
    %921 = vmatprep.subr.mxu0 0.0
    %922 = vmatpush2.msra.mxu0 %v270
    %923 = vmatprep.subr.mxu0 0.0
    %924 = vmatpush2.msra.mxu0 %v269
    %925 = vmatprep.subr.mxu0 0.0
    %926 = vmatpush2.msra.mxu0 %v268
    %927 = vmatprep.subr.mxu0 0.0
    %928 = vmatpush2.msra.mxu0 %v267
    %929 = vmatprep.mubr.f32.mxu0 %v48
    %930 = vmatmul.mubr.f32.gmra.mxu0 %v47
    %v931 = vpop.f32.mrf.mxu0
    %v932 = vadd.f32 %v862, %v931
    %v933 = vpop.f32.mrf.mxu0
    %934 = vdwg.mxu0
    %935 = vmatprep.subr.mxu0 0.0
    %936 = vmatpush1.msra.mxu0 %v298
    %937 = vmatprep.subr.mxu0 0.0
    %938 = vmatpush1.msra.mxu0 %v297
    %939 = vmatprep.subr.mxu0 0.0
    %940 = vmatpush1.msra.mxu0 %v296
    %941 = vmatprep.subr.mxu0 0.0
    %942 = vmatpush1.msra.mxu0 %v295
    %943 = vmatprep.subr.mxu0 0.0
    %944 = vmatpush1.msra.mxu0 %v294
    %945 = vmatprep.subr.mxu0 0.0
    %946 = vmatpush1.msra.mxu0 %v293
    %947 = vmatprep.subr.mxu0 0.0
    %948 = vmatpush1.msra.mxu0 %v292
    %949 = vmatprep.subr.mxu0 0.0
    %950 = vmatpush1.msra.mxu0 %v291
    %951 = vmatprep.subr.mxu0 0.0
    %952 = vmatpush1.msra.mxu0 %v290
    %953 = vmatprep.subr.mxu0 0.0
    %954 = vmatpush1.msra.mxu0 %v289
    %955 = vmatprep.subr.mxu0 0.0
    %956 = vmatpush1.msra.mxu0 %v288
    %957 = vmatprep.subr.mxu0 0.0
    %958 = vmatpush1.msra.mxu0 %v287
    %959 = vmatprep.subr.mxu0 0.0
    %960 = vmatpush1.msra.mxu0 %v286
    %961 = vmatprep.subr.mxu0 0.0
    %962 = vmatpush1.msra.mxu0 %v285
    %963 = vmatprep.subr.mxu0 0.0
    %964 = vmatpush1.msra.mxu0 %v284
    %965 = vmatprep.subr.mxu0 0.0
    %966 = vmatpush1.msra.mxu0 %v283
    %967 = vmatprep.subr.mxu0 0.0
    %968 = vmatpush2.msra.mxu0 %v314
    %969 = vmatprep.subr.mxu0 0.0
    %970 = vmatpush2.msra.mxu0 %v313
    %971 = vmatprep.subr.mxu0 0.0
    %972 = vmatpush2.msra.mxu0 %v312
    %973 = vmatprep.subr.mxu0 0.0
    %974 = vmatpush2.msra.mxu0 %v311
    %975 = vmatprep.subr.mxu0 0.0
    %976 = vmatpush2.msra.mxu0 %v310
    %977 = vmatprep.subr.mxu0 0.0
    %978 = vmatpush2.msra.mxu0 %v309
    %979 = vmatprep.subr.mxu0 0.0
    %980 = vmatpush2.msra.mxu0 %v308
    %981 = vmatprep.subr.mxu0 0.0
    %982 = vmatpush2.msra.mxu0 %v307
    %983 = vmatprep.subr.mxu0 0.0
    %984 = vmatpush2.msra.mxu0 %v306
    %985 = vmatprep.subr.mxu0 0.0
    %986 = vmatpush2.msra.mxu0 %v305
    %987 = vmatprep.subr.mxu0 0.0
    %988 = vmatpush2.msra.mxu0 %v304
    %989 = vmatprep.subr.mxu0 0.0
    %990 = vmatpush2.msra.mxu0 %v303
    %991 = vmatprep.subr.mxu0 0.0
    %992 = vmatpush2.msra.mxu0 %v302
    %993 = vmatprep.subr.mxu0 0.0
    %994 = vmatpush2.msra.mxu0 %v301
    %995 = vmatprep.subr.mxu0 0.0
    %996 = vmatpush2.msra.mxu0 %v300
    %997 = vmatprep.subr.mxu0 0.0
    %998 = vmatpush2.msra.mxu0 %v299
    %999 = vmatprep.mubr.f32.mxu0 %v50
    %1000 = vmatmul.mubr.f32.gmra.mxu0 %v49
    %v1001 = vpop.f32.mrf.mxu0
    %v1002 = vadd.f32 %v932, %v1001
    %v1003 = vpop.f32.mrf.mxu0
    %1004 = vdwg.mxu0
    %1005 = vmatprep.subr.mxu0 0.0
    %1006 = vmatpush1.msra.mxu0 %v330
    %1007 = vmatprep.subr.mxu0 0.0
    %1008 = vmatpush1.msra.mxu0 %v329
    %1009 = vmatprep.subr.mxu0 0.0
    %1010 = vmatpush1.msra.mxu0 %v328
    %1011 = vmatprep.subr.mxu0 0.0
    %1012 = vmatpush1.msra.mxu0 %v327
    %1013 = vmatprep.subr.mxu0 0.0
    %1014 = vmatpush1.msra.mxu0 %v326
    %1015 = vmatprep.subr.mxu0 0.0
    %1016 = vmatpush1.msra.mxu0 %v325
    %1017 = vmatprep.subr.mxu0 0.0
    %1018 = vmatpush1.msra.mxu0 %v324
    %1019 = vmatprep.subr.mxu0 0.0
    %1020 = vmatpush1.msra.mxu0 %v323
    %1021 = vmatprep.subr.mxu0 0.0
    %1022 = vmatpush1.msra.mxu0 %v322
    %1023 = vmatprep.subr.mxu0 0.0
    %1024 = vmatpush1.msra.mxu0 %v321
    %1025 = vmatprep.subr.mxu0 0.0
    %1026 = vmatpush1.msra.mxu0 %v320
    %1027 = vmatprep.subr.mxu0 0.0
    %1028 = vmatpush1.msra.mxu0 %v319
    %1029 = vmatprep.subr.mxu0 0.0
    %1030 = vmatpush1.msra.mxu0 %v318
    %1031 = vmatprep.subr.mxu0 0.0
    %1032 = vmatpush1.msra.mxu0 %v317
    %1033 = vmatprep.subr.mxu0 0.0
    %1034 = vmatpush1.msra.mxu0 %v316
    %1035 = vmatprep.subr.mxu0 0.0
    %1036 = vmatpush1.msra.mxu0 %v315
    %1037 = vmatprep.subr.mxu0 0.0
    %1038 = vmatpush2.msra.mxu0 %v346
    %1039 = vmatprep.subr.mxu0 0.0
    %1040 = vmatpush2.msra.mxu0 %v345
    %1041 = vmatprep.subr.mxu0 0.0
    %1042 = vmatpush2.msra.mxu0 %v344
    %1043 = vmatprep.subr.mxu0 0.0
    %1044 = vmatpush2.msra.mxu0 %v343
    %1045 = vmatprep.subr.mxu0 0.0
    %1046 = vmatpush2.msra.mxu0 %v342
    %1047 = vmatprep.subr.mxu0 0.0
    %1048 = vmatpush2.msra.mxu0 %v341
    %1049 = vmatprep.subr.mxu0 0.0
    %1050 = vmatpush2.msra.mxu0 %v340
    %1051 = vmatprep.subr.mxu0 0.0
    %1052 = vmatpush2.msra.mxu0 %v339
    %1053 = vmatprep.subr.mxu0 0.0
    %1054 = vmatpush2.msra.mxu0 %v338
    %1055 = vmatprep.subr.mxu0 0.0
    %1056 = vmatpush2.msra.mxu0 %v337
    %1057 = vmatprep.subr.mxu0 0.0
    %1058 = vmatpush2.msra.mxu0 %v336
    %1059 = vmatprep.subr.mxu0 0.0
    %1060 = vmatpush2.msra.mxu0 %v335
    %1061 = vmatprep.subr.mxu0 0.0
    %1062 = vmatpush2.msra.mxu0 %v334
    %1063 = vmatprep.subr.mxu0 0.0
    %1064 = vmatpush2.msra.mxu0 %v333
    %1065 = vmatprep.subr.mxu0 0.0
    %1066 = vmatpush2.msra.mxu0 %v332
    %1067 = vmatprep.subr.mxu0 0.0
    %1068 = vmatpush2.msra.mxu0 %v331
    %1069 = vmatprep.mubr.f32.mxu0 %v52
    %1070 = vmatmul.mubr.f32.gmra.mxu0 %v51
    %v1071 = vpop.f32.mrf.mxu0
    %v1072 = vadd.f32 %v1002, %v1071
    %v1073 = vpop.f32.mrf.mxu0
    %1074 = vdwg.mxu0
    %1075 = vmatprep.subr.mxu0 0.0
    %1076 = vmatpush1.msra.mxu0 %v362
    %1077 = vmatprep.subr.mxu0 0.0
    %1078 = vmatpush1.msra.mxu0 %v361
    %1079 = vmatprep.subr.mxu0 0.0
    %1080 = vmatpush1.msra.mxu0 %v360
    %1081 = vmatprep.subr.mxu0 0.0
    %1082 = vmatpush1.msra.mxu0 %v359
    %1083 = vmatprep.subr.mxu0 0.0
    %1084 = vmatpush1.msra.mxu0 %v358
    %1085 = vmatprep.subr.mxu0 0.0
    %1086 = vmatpush1.msra.mxu0 %v357
    %1087 = vmatprep.subr.mxu0 0.0
    %1088 = vmatpush1.msra.mxu0 %v356
    %1089 = vmatprep.subr.mxu0 0.0
    %1090 = vmatpush1.msra.mxu0 %v355
    %1091 = vmatprep.subr.mxu0 0.0
    %1092 = vmatpush1.msra.mxu0 %v354
    %1093 = vmatprep.subr.mxu0 0.0
    %1094 = vmatpush1.msra.mxu0 %v353
    %1095 = vmatprep.subr.mxu0 0.0
    %1096 = vmatpush1.msra.mxu0 %v352
    %1097 = vmatprep.subr.mxu0 0.0
    %1098 = vmatpush1.msra.mxu0 %v351
    %1099 = vmatprep.subr.mxu0 0.0
    %1100 = vmatpush1.msra.mxu0 %v350
    %1101 = vmatprep.subr.mxu0 0.0
    %1102 = vmatpush1.msra.mxu0 %v349
    %1103 = vmatprep.subr.mxu0 0.0
    %1104 = vmatpush1.msra.mxu0 %v348
    %1105 = vmatprep.subr.mxu0 0.0
    %1106 = vmatpush1.msra.mxu0 %v347
    %1107 = vmatprep.subr.mxu0 0.0
    %1108 = vmatpush2.msra.mxu0 %v378
    %1109 = vmatprep.subr.mxu0 0.0
    %1110 = vmatpush2.msra.mxu0 %v377
    %1111 = vmatprep.subr.mxu0 0.0
    %1112 = vmatpush2.msra.mxu0 %v376
    %1113 = vmatprep.subr.mxu0 0.0
    %1114 = vmatpush2.msra.mxu0 %v375
    %1115 = vmatprep.subr.mxu0 0.0
    %1116 = vmatpush2.msra.mxu0 %v374
    %1117 = vmatprep.subr.mxu0 0.0
    %1118 = vmatpush2.msra.mxu0 %v373
    %1119 = vmatprep.subr.mxu0 0.0
    %1120 = vmatpush2.msra.mxu0 %v372
    %1121 = vmatprep.subr.mxu0 0.0
    %1122 = vmatpush2.msra.mxu0 %v371
    %1123 = vmatprep.subr.mxu0 0.0
    %1124 = vmatpush2.msra.mxu0 %v370
    %1125 = vmatprep.subr.mxu0 0.0
    %1126 = vmatpush2.msra.mxu0 %v369
    %1127 = vmatprep.subr.mxu0 0.0
    %1128 = vmatpush2.msra.mxu0 %v368
    %1129 = vmatprep.subr.mxu0 0.0
    %1130 = vmatpush2.msra.mxu0 %v367
    %1131 = vmatprep.subr.mxu0 0.0
    %1132 = vmatpush2.msra.mxu0 %v366
    %1133 = vmatprep.subr.mxu0 0.0
    %1134 = vmatpush2.msra.mxu0 %v365
    %1135 = vmatprep.subr.mxu0 0.0
    %1136 = vmatpush2.msra.mxu0 %v364
    %1137 = vmatprep.subr.mxu0 0.0
    %1138 = vmatpush2.msra.mxu0 %v363
    %1139 = vmatprep.mubr.f32.mxu0 %v54
    %1140 = vmatmul.mubr.f32.gmra.mxu0 %v53
    %v1141 = vpop.f32.mrf.mxu0
    %v1142 = vadd.f32 %v1072, %v1141
    %v1143 = vpop.f32.mrf.mxu0
    %1144 = vdwg.mxu0
    %1145 = vmatprep.subr.mxu0 0.0
    %1146 = vmatpush1.msra.mxu0 %v394
    %1147 = vmatprep.subr.mxu0 0.0
    %1148 = vmatpush1.msra.mxu0 %v393
    %1149 = vmatprep.subr.mxu0 0.0
    %1150 = vmatpush1.msra.mxu0 %v392
    %1151 = vmatprep.subr.mxu0 0.0
    %1152 = vmatpush1.msra.mxu0 %v391
    %1153 = vmatprep.subr.mxu0 0.0
    %1154 = vmatpush1.msra.mxu0 %v390
    %1155 = vmatprep.subr.mxu0 0.0
    %1156 = vmatpush1.msra.mxu0 %v389
    %1157 = vmatprep.subr.mxu0 0.0
    %1158 = vmatpush1.msra.mxu0 %v388
    %1159 = vmatprep.subr.mxu0 0.0
    %1160 = vmatpush1.msra.mxu0 %v387
    %1161 = vmatprep.subr.mxu0 0.0
    %1162 = vmatpush1.msra.mxu0 %v386
    %1163 = vmatprep.subr.mxu0 0.0
    %1164 = vmatpush1.msra.mxu0 %v385
    %1165 = vmatprep.subr.mxu0 0.0
    %1166 = vmatpush1.msra.mxu0 %v384
    %1167 = vmatprep.subr.mxu0 0.0
    %1168 = vmatpush1.msra.mxu0 %v383
    %1169 = vmatprep.subr.mxu0 0.0
    %1170 = vmatpush1.msra.mxu0 %v382
    %1171 = vmatprep.subr.mxu0 0.0
    %1172 = vmatpush1.msra.mxu0 %v381
    %1173 = vmatprep.subr.mxu0 0.0
    %1174 = vmatpush1.msra.mxu0 %v380
    %1175 = vmatprep.subr.mxu0 0.0
    %1176 = vmatpush1.msra.mxu0 %v379
    %1177 = vmatprep.subr.mxu0 0.0
    %1178 = vmatpush2.msra.mxu0 %v410
    %1179 = vmatprep.subr.mxu0 0.0
    %1180 = vmatpush2.msra.mxu0 %v409
    %1181 = vmatprep.subr.mxu0 0.0
    %1182 = vmatpush2.msra.mxu0 %v408
    %1183 = vmatprep.subr.mxu0 0.0
    %1184 = vmatpush2.msra.mxu0 %v407
    %1185 = vmatprep.subr.mxu0 0.0
    %1186 = vmatpush2.msra.mxu0 %v406
    %1187 = vmatprep.subr.mxu0 0.0
    %1188 = vmatpush2.msra.mxu0 %v405
    %1189 = vmatprep.subr.mxu0 0.0
    %1190 = vmatpush2.msra.mxu0 %v404
    %1191 = vmatprep.subr.mxu0 0.0
    %1192 = vmatpush2.msra.mxu0 %v403
    %1193 = vmatprep.subr.mxu0 0.0
    %1194 = vmatpush2.msra.mxu0 %v402
    %1195 = vmatprep.subr.mxu0 0.0
    %1196 = vmatpush2.msra.mxu0 %v401
    %1197 = vmatprep.subr.mxu0 0.0
    %1198 = vmatpush2.msra.mxu0 %v400
    %1199 = vmatprep.subr.mxu0 0.0
    %1200 = vmatpush2.msra.mxu0 %v399
    %1201 = vmatprep.subr.mxu0 0.0
    %1202 = vmatpush2.msra.mxu0 %v398
    %1203 = vmatprep.subr.mxu0 0.0
    %1204 = vmatpush2.msra.mxu0 %v397
    %1205 = vmatprep.subr.mxu0 0.0
    %1206 = vmatpush2.msra.mxu0 %v396
    %1207 = vmatprep.subr.mxu0 0.0
    %1208 = vmatpush2.msra.mxu0 %v395
    %1209 = vmatprep.mubr.f32.mxu0 %v56
    %1210 = vmatmul.mubr.f32.gmra.mxu0 %v55
    %v1211 = vpop.f32.mrf.mxu0
    %v1212 = vadd.f32 %v1142, %v1211
    %v1213 = vpop.f32.mrf.mxu0
    %1214 = vdwg.mxu0
    %1215 = vmatprep.subr.mxu0 0.0
    %1216 = vmatpush1.msra.mxu0 %v426
    %1217 = vmatprep.subr.mxu0 0.0
    %1218 = vmatpush1.msra.mxu0 %v425
    %1219 = vmatprep.subr.mxu0 0.0
    %1220 = vmatpush1.msra.mxu0 %v424
    %1221 = vmatprep.subr.mxu0 0.0
    %1222 = vmatpush1.msra.mxu0 %v423
    %1223 = vmatprep.subr.mxu0 0.0
    %1224 = vmatpush1.msra.mxu0 %v422
    %1225 = vmatprep.subr.mxu0 0.0
    %1226 = vmatpush1.msra.mxu0 %v421
    %1227 = vmatprep.subr.mxu0 0.0
    %1228 = vmatpush1.msra.mxu0 %v420
    %1229 = vmatprep.subr.mxu0 0.0
    %1230 = vmatpush1.msra.mxu0 %v419
    %1231 = vmatprep.subr.mxu0 0.0
    %1232 = vmatpush1.msra.mxu0 %v418
    %1233 = vmatprep.subr.mxu0 0.0
    %1234 = vmatpush1.msra.mxu0 %v417
    %1235 = vmatprep.subr.mxu0 0.0
    %1236 = vmatpush1.msra.mxu0 %v416
    %1237 = vmatprep.subr.mxu0 0.0
    %1238 = vmatpush1.msra.mxu0 %v415
    %1239 = vmatprep.subr.mxu0 0.0
    %1240 = vmatpush1.msra.mxu0 %v414
    %1241 = vmatprep.subr.mxu0 0.0
    %1242 = vmatpush1.msra.mxu0 %v413
    %1243 = vmatprep.subr.mxu0 0.0
    %1244 = vmatpush1.msra.mxu0 %v412
    %1245 = vmatprep.subr.mxu0 0.0
    %1246 = vmatpush1.msra.mxu0 %v411
    %1247 = vmatprep.subr.mxu0 0.0
    %1248 = vmatpush2.msra.mxu0 0.0
    %1249 = vmatprep.subr.mxu0 0.0
    %1250 = vmatpush2.msra.mxu0 0.0
    %1251 = vmatprep.subr.mxu0 0.0
    %1252 = vmatpush2.msra.mxu0 0.0
    %1253 = vmatprep.subr.mxu0 0.0
    %1254 = vmatpush2.msra.mxu0 0.0
    %1255 = vmatprep.subr.mxu0 0.0
    %1256 = vmatpush2.msra.mxu0 0.0
    %1257 = vmatprep.subr.mxu0 0.0
    %1258 = vmatpush2.msra.mxu0 0.0
    %1259 = vmatprep.subr.mxu0 0.0
    %1260 = vmatpush2.msra.mxu0 0.0
    %1261 = vmatprep.subr.mxu0 0.0
    %1262 = vmatpush2.msra.mxu0 0.0
    %1263 = vmatprep.subr.mxu0 0.0
    %1264 = vmatpush2.msra.mxu0 0.0
    %1265 = vmatprep.subr.mxu0 0.0
    %1266 = vmatpush2.msra.mxu0 %v433
    %1267 = vmatprep.subr.mxu0 0.0
    %1268 = vmatpush2.msra.mxu0 %v432
    %1269 = vmatprep.subr.mxu0 0.0
    %1270 = vmatpush2.msra.mxu0 %v431
    %1271 = vmatprep.subr.mxu0 0.0
    %1272 = vmatpush2.msra.mxu0 %v430
    %1273 = vmatprep.subr.mxu0 0.0
    %1274 = vmatpush2.msra.mxu0 %v429
    %1275 = vmatprep.subr.mxu0 0.0
    %1276 = vmatpush2.msra.mxu0 %v428
    %1277 = vmatprep.subr.mxu0 0.0
    %1278 = vmatpush2.msra.mxu0 %v427
    %1279 = vmatprep.mubr.f32.mxu0 %v443
    %1280 = vmatmul.mubr.f32.gmra.mxu0 %v57
    %v1281 = vpop.f32.mrf.mxu0
    %v1282 = vadd.f32 %v1212, %v1281
    %v1283 = vpop.f32.mrf.mxu0
    %1284 = vdwg.mxu0
    %v1285 = vmax.f32 %v1282, 0.0
    %v1286 = vld [vmem:[%s3] sm:$0xff]
    %v1287 = vld [vmem:[%s3 + $0x8] sm:$0xff]
    %v1288 = vld [vmem:[%s3 + $0x10] sm:$0xff]
    %v1289 = vld [vmem:[%s3 + $0x18] sm:$0xff]
    %v1290 = vld [vmem:[%s3 + $0x20] sm:$0xff]
    %v1291 = vld [vmem:[%s3 + $0x28] sm:$0xff]
    %v1292 = vld [vmem:[%s3 + $0x30] sm:$0x3]
    %v1293 = vld [vmem:[%s4] sm:$0x1]
    %v1295 = vlaneseq
    %v1296 = vshrl.u32 %v1295, 7
    %v1297 = vsub.s32 0, %v1296
    %v1298 = vrot.slane %v1293, %v1297
    %vm1300 = vcmask 408576
    %v1302 = vsel %vm1300, %v1285, 0
    %vm1304 = vcmask 1041408
    %v1306 = vsel %vm1304, %v1292, 0
    %1308 = vmatprep.subr.mxu0 0.0
    %1309 = vmatpush1.msra.mxu0 0.0
    %1310 = vmatprep.subr.mxu0 0.0
    %1311 = vmatpush1.msra.mxu0 0.0
    %1312 = vmatprep.subr.mxu0 0.0
    %1313 = vmatpush1.msra.mxu0 0.0
    %1314 = vmatprep.subr.mxu0 0.0
    %1315 = vmatpush1.msra.mxu0 0.0
    %1316 = vmatprep.subr.mxu0 0.0
    %1317 = vmatpush1.msra.mxu0 0.0
    %1318 = vmatprep.subr.mxu0 0.0
    %1319 = vmatpush1.msra.mxu0 0.0
    %1320 = vmatprep.subr.mxu0 0.0
    %1321 = vmatpush1.msra.mxu0 0.0
    %1322 = vmatprep.subr.mxu0 0.0
    %1323 = vmatpush1.msra.mxu0 0.0
    %1324 = vmatprep.subr.mxu0 0.0
    %1325 = vmatpush1.msra.mxu0 0.0
    %1326 = vmatprep.subr.mxu0 0.0
    %1327 = vmatpush1.msra.mxu0 %v1306
    %1328 = vmatprep.subr.mxu0 0.0
    %1329 = vmatpush1.msra.mxu0 %v1291
    %1330 = vmatprep.subr.mxu0 0.0
    %1331 = vmatpush1.msra.mxu0 %v1290
    %1332 = vmatprep.subr.mxu0 0.0
    %1333 = vmatpush1.msra.mxu0 %v1289
    %1334 = vmatprep.subr.mxu0 0.0
    %1335 = vmatpush1.msra.mxu0 %v1288
    %1336 = vmatprep.subr.mxu0 0.0
    %1337 = vmatpush1.msra.mxu0 %v1287
    %1338 = vmatprep.subr.mxu0 0.0
    %1339 = vmatpush1.msra.mxu0 %v1286
    %1340 = vmatprep.subr.mxu0 0.0
    %1341 = vmatpush2.msra.mxu0 0.0
    %1342 = vmatprep.subr.mxu0 0.0
    %1343 = vmatpush2.msra.mxu0 0.0
    %1344 = vmatprep.subr.mxu0 0.0
    %1345 = vmatpush2.msra.mxu0 0.0
    %1346 = vmatprep.subr.mxu0 0.0
    %1347 = vmatpush2.msra.mxu0 0.0
    %1348 = vmatprep.subr.mxu0 0.0
    %1349 = vmatpush2.msra.mxu0 0.0
    %1350 = vmatprep.subr.mxu0 0.0
    %1351 = vmatpush2.msra.mxu0 0.0
    %1352 = vmatprep.subr.mxu0 0.0
    %1353 = vmatpush2.msra.mxu0 0.0
    %1354 = vmatprep.subr.mxu0 0.0
    %1355 = vmatpush2.msra.mxu0 0.0
    %1356 = vmatprep.subr.mxu0 0.0
    %1357 = vmatpush2.msra.mxu0 0.0
    %1358 = vmatprep.subr.mxu0 0.0
    %1359 = vmatpush2.msra.mxu0 0.0
    %1360 = vmatprep.subr.mxu0 0.0
    %1361 = vmatpush2.msra.mxu0 0.0
    %1362 = vmatprep.subr.mxu0 0.0
    %1363 = vmatpush2.msra.mxu0 0.0
    %1364 = vmatprep.subr.mxu0 0.0
    %1365 = vmatpush2.msra.mxu0 0.0
    %1366 = vmatprep.subr.mxu0 0.0
    %1367 = vmatpush2.msra.mxu0 0.0
    %1368 = vmatprep.subr.mxu0 0.0
    %1369 = vmatpush2.msra.mxu0 0.0
    %1370 = vmatprep.subr.mxu0 0.0
    %1371 = vmatpush2.msra.mxu0 0.0
    %1372 = vmatprep.mubr.f32.mxu0 0.0
    %1373 = vmatmul.mubr.f32.gmra.mxu0 %v1302
    %v1374 = vpop.f32.mrf.mxu0
    %v1375 = vadd.f32 %v1298, %v1374
    %v1376 = vpop.f32.mrf.mxu0
    %1377 = vdwg.mxu0
    %v1378 = vmax.f32 %v1375, 0.0
    %v1379 = vld [vmem:[%s5] sm:$0xff]
    %v1380 = vld [vmem:[%s5 + $0x8] sm:$0xff]
    %v1381 = vld [vmem:[%s5 + $0x10] sm:$0xff]
    %v1382 = vld [vmem:[%s5 + $0x18] sm:$0x3f]
    %v1383 = vld [vmem:[%s6] sm:$0x1]
    %v1385 = vlaneseq
    %v1386 = vshrl.u32 %v1385, 7
    %v1387 = vsub.s32 0, %v1386
    %v1388 = vrot.slane %v1383, %v1387
    %vm1390 = vcmask 244736
    %v1392 = vsel %vm1390, %v1378, 0
    %vm1394 = vcmask 1045504
    %v1396 = vsel %vm1394, %v1382, 0
    %1398 = vmatprep.subr.mxu0 0.0
    %1399 = vmatpush1.msra.mxu0 0.0
    %1400 = vmatprep.subr.mxu0 0.0
    %1401 = vmatpush1.msra.mxu0 0.0
    %1402 = vmatprep.subr.mxu0 0.0
    %1403 = vmatpush1.msra.mxu0 0.0
    %1404 = vmatprep.subr.mxu0 0.0
    %1405 = vmatpush1.msra.mxu0 0.0
    %1406 = vmatprep.subr.mxu0 0.0
    %1407 = vmatpush1.msra.mxu0 0.0
    %1408 = vmatprep.subr.mxu0 0.0
    %1409 = vmatpush1.msra.mxu0 0.0
    %1410 = vmatprep.subr.mxu0 0.0
    %1411 = vmatpush1.msra.mxu0 0.0
    %1412 = vmatprep.subr.mxu0 0.0
    %1413 = vmatpush1.msra.mxu0 0.0
    %1414 = vmatprep.subr.mxu0 0.0
    %1415 = vmatpush1.msra.mxu0 0.0
    %1416 = vmatprep.subr.mxu0 0.0
    %1417 = vmatpush1.msra.mxu0 0.0
    %1418 = vmatprep.subr.mxu0 0.0
    %1419 = vmatpush1.msra.mxu0 0.0
    %1420 = vmatprep.subr.mxu0 0.0
    %1421 = vmatpush1.msra.mxu0 0.0
    %1422 = vmatprep.subr.mxu0 0.0
    %1423 = vmatpush1.msra.mxu0 %v1396
    %1424 = vmatprep.subr.mxu0 0.0
    %1425 = vmatpush1.msra.mxu0 %v1381
    %1426 = vmatprep.subr.mxu0 0.0
    %1427 = vmatpush1.msra.mxu0 %v1380
    %1428 = vmatprep.subr.mxu0 0.0
    %1429 = vmatpush1.msra.mxu0 %v1379
    %1430 = vmatprep.subr.mxu0 0.0
    %1431 = vmatpush2.msra.mxu0 0.0
    %1432 = vmatprep.subr.mxu0 0.0
    %1433 = vmatpush2.msra.mxu0 0.0
    %1434 = vmatprep.subr.mxu0 0.0
    %1435 = vmatpush2.msra.mxu0 0.0
    %1436 = vmatprep.subr.mxu0 0.0
    %1437 = vmatpush2.msra.mxu0 0.0
    %1438 = vmatprep.subr.mxu0 0.0
    %1439 = vmatpush2.msra.mxu0 0.0
    %1440 = vmatprep.subr.mxu0 0.0
    %1441 = vmatpush2.msra.mxu0 0.0
    %1442 = vmatprep.subr.mxu0 0.0
    %1443 = vmatpush2.msra.mxu0 0.0
    %1444 = vmatprep.subr.mxu0 0.0
    %1445 = vmatpush2.msra.mxu0 0.0
    %1446 = vmatprep.subr.mxu0 0.0
    %1447 = vmatpush2.msra.mxu0 0.0
    %1448 = vmatprep.subr.mxu0 0.0
    %1449 = vmatpush2.msra.mxu0 0.0
    %1450 = vmatprep.subr.mxu0 0.0
    %1451 = vmatpush2.msra.mxu0 0.0
    %1452 = vmatprep.subr.mxu0 0.0
    %1453 = vmatpush2.msra.mxu0 0.0
    %1454 = vmatprep.subr.mxu0 0.0
    %1455 = vmatpush2.msra.mxu0 0.0
    %1456 = vmatprep.subr.mxu0 0.0
    %1457 = vmatpush2.msra.mxu0 0.0
    %1458 = vmatprep.subr.mxu0 0.0
    %1459 = vmatpush2.msra.mxu0 0.0
    %1460 = vmatprep.subr.mxu0 0.0
    %1461 = vmatpush2.msra.mxu0 0.0
    %1462 = vmatprep.mubr.f32.mxu0 0.0
    %1463 = vmatmul.mubr.f32.gmra.mxu0 %v1392
    %v1464 = vpop.f32.mrf.mxu0
    %v1465 = vadd.f32 %v1388, %v1464
    %v1466 = vpop.f32.mrf.mxu0
    %1467 = vdwg.mxu0
    %v1468 = vmax.f32 %v1465, 0.0
    %1469 = vxpose.xlu0.b32.start [1/16] %v1468, 128
    %1470 = vxpose.xlu0.b32.cont [2/16] 0.0, 128
    %1471 = vxpose.xlu0.b32.cont [3/16] 0.0, 128
    %1472 = vxpose.xlu0.b32.cont [4/16] 0.0, 128
    %1473 = vxpose.xlu0.b32.cont [5/16] 0.0, 128
    %1474 = vxpose.xlu0.b32.cont [6/16] 0.0, 128
    %1475 = vxpose.xlu0.b32.cont [7/16] 0.0, 128
    %1476 = vxpose.xlu0.b32.cont [8/16] 0.0, 128
    %1477 = vxpose.xlu0.b32.cont [9/16] 0.0, 128
    %1478 = vxpose.xlu0.b32.cont [10/16] 0.0, 128
    %1479 = vxpose.xlu0.b32.cont [11/16] 0.0, 128
    %1480 = vxpose.xlu0.b32.cont [12/16] 0.0, 128
    %1481 = vxpose.xlu0.b32.cont [13/16] 0.0, 128
    %1482 = vxpose.xlu0.b32.cont [14/16] 0.0, 128
    %1483 = vxpose.xlu0.b32.cont [15/16] 0.0, 128
    %1484 = vxpose.xlu0.b32.end [16/16] 0.0, 128
    %v1485 = vpop.trf.xlu0
    %v1486 = vpop.trf.xlu0
    %v1487 = vpop.trf.xlu0
    %v1488 = vpop.trf.xlu0
    %v1489 = vpop.trf.xlu0
    %v1490 = vpop.trf.xlu0
    %v1491 = vpop.trf.xlu0
    %v1492 = vpop.trf.xlu0
    %v1493 = vpop.trf.xlu0
    %v1494 = vpop.trf.xlu0
    %v1495 = vpop.trf.xlu0
    %v1496 = vpop.trf.xlu0
    %v1497 = vpop.trf.xlu0
    %v1498 = vpop.trf.xlu0
    %v1499 = vpop.trf.xlu0
    %v1500 = vpop.trf.xlu0
    %v1501 = vld [vmem:[%s7] sm:$0xff]
    %v1502 = vld [vmem:[%s7 + $0x8] sm:$0x3]
    %1504 = vset.pattern.permute.xlu0 0
    %1505 = vperm.xlu0 %1504, %v1501
    %v1506 = vpop.permute.xlu0 %1505
    %1509 = vset.pattern.permute.xlu0 0
    %1510 = vperm.xlu0 %1509, %v1502
    %v1511 = vpop.permute.xlu0 %1510
    %v1513 = vmul.f32 %v1506, %v1485
    %v1514 = vmul.f32 %v1511, %v1486
    %vm1515 = vcmask 64512
    %v1516 = vsel %vm1515, %v1513, 0.0
    %vm1517 = vcmask 58368
    %v1518 = vsel %vm1517, %v1514, 0.0
    %v1519 = vadd.f32 %v1516, %v1518
    %v1520 = vrot.slane %v1519, 4
    %v1521 = vadd.f32 %v1519, %v1520
    %v1522 = vrot.slane %v1521, 2
    %v1523 = vadd.f32 %v1521, %v1522
    %v1524 = vrot.slane %v1523, 1
    %v1525 = vadd.f32 %v1523, %v1524
    %v1526 = vld [vmem:[#allocation2] sm:$0x1]
    %1528 = vset.pattern.permute.xlu0 0
    %1529 = vperm.xlu0 %1528, %v1526
    %v1530 = vpop.permute.xlu0 %1529
    %v1532 = vlaneseq
    %v1533 = vshrl.u32 %v1532, 7
    %v1534 = vsub.s32 0, %v1533
    %v1535 = vrot.slane %v1530, %v1534
    %v1536 = vadd.f32 %v1525, %v1535
    %v1537 = vxor.u32 %v1536, 2147483648
    %v1538 = vmul.f32 %v1537, 1.442695
    %v1539 = vpow.pop %v1538
    %v1540 = vadd.f32 %v1539, 1.0
    %v1541 = vrcp.pop %v1540
    %v1542 = vmul.f32 1.0, %v1541
    %vm1543 = vcmask 57344
    %1544 = vst.msk [vmem:[#allocation3] sm:$0x1] %vm1543, %v1542
    // Predicated region
    $region38: #{tpu_custom_call.1} parent=1 // pred_check
      _
    $region39: #{tpu_custom_call.1} parent=1 // pred_check_branch
      %1546 = sbr.rel (0) target = $region41
    $region40: #{tpu_custom_call.1} parent=1 // pred_region
      %s1548 = ssub.s32 16, 16
      %1549 = vsyncadd [#allocation4], %s1548
      %s1551 = sshll.u32 [#allocation3], 4
      %s1552 = int_to_ptr.vmem [resolvable:$true] %s1551
      %1554 = dma.vmem_to_hbm [thread:$0]  %s1552, 16, %s9, [#allocation4]
    $region41: #{tpu_custom_call.1} parent=1 // pred_fallthru
      _
    // Predicated region
    $region42: #{tpu_custom_call.1} parent=1 // pred_check
      _
    $region43: #{tpu_custom_call.1} parent=1 // pred_check_branch
      %1556 = sbr.rel (0) target = $region45
    $region44: #{tpu_custom_call.1} parent=1 // pred_region
      %1557 = dma.done [#allocation4], 16
    $region45: #{tpu_custom_call.1} parent=1 // pred_fallthru
      _
    %1558 = vsyncpa [#allocation4], 1

</llo_original>
